<compile_context>
chip_gen: v5e
topology: v5e:2x2
jax: 0.10.0
libtpu: 0.0.40
codegen_flags: <defaults>
</compile_context>

<pallas_src>
import jax
import jax.numpy as jnp
from jax import lax
from jax.experimental import pallas as pl
from jax.experimental.pallas import tpu as pltpu


# Approx reciprocal deviates from exact division by ~2^-12 relative; set to
# False if strict parity with the PyTorch softmax is required.
APPROX_RECIPROCAL = True


# ----------------------------- in-kernel math -----------------------------

def _recip(x):
    if APPROX_RECIPROCAL:
        return pl.reciprocal(x, approx=True)
    return 1.0 / x


def _layernorm(x, w, b, eps=1e-5):
    mu = jnp.mean(x, axis=-1, keepdims=True)
    var = jnp.mean((x - mu) ** 2, axis=-1, keepdims=True)
    return (x - mu) * lax.rsqrt(var + eps) * w + b


def _softmax_last(x):
    m = jnp.max(x, axis=-1, keepdims=True)
    e = jnp.exp(x - m)
    return e * _recip(jnp.sum(e, axis=-1, keepdims=True))


def _gelu_exact(x):
    # Matches torch.nn.functional.gelu (erf form).
    return 0.5 * x * (1.0 + lax.erf(x * 0.7071067811865476))


def _swap_major_sublane(t, eq):
    """3-D relayout with the lane (minor) dim fixed, e.g. 'mhd->hmd'."""
    if hasattr(pltpu, "einshape"):
        return pltpu.einshape(eq, t)
    return jnp.transpose(t, (1, 0, 2))


# ------------------------------- the kernel -------------------------------

def make_kernel(N, C, H, TB):
    hd = C // H
    bf16 = jnp.bfloat16
    f32 = jnp.float32

    def kernel(x_ref, pos_ref, vec_ref, qw_ref, kw_ref, vw_ref, pw_ref,
               fc1w_ref, fc1b_ref, fc2w_ref,
               nfw_ref, nfb_ref, poolw_ref, poolb_ref, fcw_ref, fcb_ref,
               out_ref, x_state):
        layer = pl.program_id(1)
        n_layers = pl.num_programs(1)

        # --- first layer step for this batch tile: add sinusoidal positional
        #     embedding (dropout = identity at inference) --------------------
        @pl.when(layer == 0)
        def _():
            x_state[...] = (x_ref[...] + pos_ref[...]).reshape(TB * N, C)

        src = x_state[...]                                   # (TB*N, C) f32

        # Packed per-layer C-wide vectors: one DMA, static sublane slices.
        vecs = vec_ref[0]                                    # (8, C)
        lnp_w, lnp_b = vecs[0:1, :], vecs[1:2, :]
        proj_b = vecs[2:3, :]
        ln1_w, ln1_b = vecs[3:4, :], vecs[4:5, :]
        fc2_b = vecs[5:6, :]

        # ---------------- Attention block (pre-norm) -----------------------
        h = _layernorm(src, lnp_w, lnp_b)                    # f32
        hb = h.astype(bf16)
        # Attention scale hd**-0.5 is folded into q_w at init time.
        q = jnp.dot(hb, qw_ref[0], preferred_element_type=f32)   # (TB*N, C)
        k = jnp.dot(hb, kw_ref[0], preferred_element_type=f32)
        v = jnp.dot(hb, vw_ref[0], preferred_element_type=f32)

        def to_heads(t):                                     # (TB*N, C) -> (H*TB, N, hd)
            t = t.reshape(TB * N, H, hd)                     # split lane dim
            t = _swap_major_sublane(t, "mhd->hmd")           # (H, TB*N, hd)
            return t.reshape(H * TB, N, hd).astype(bf16)     # leading-dim regroup

        qh, kh, vh = to_heads(q), to_heads(k), to_heads(v)

        # Head-batched attention over collapsed (H*TB) batch dim.
        attn = jnp.einsum('bnd,bmd->bnm', qh, kh, preferred_element_type=f32)
        attn = _softmax_last(attn)                           # attn_drop = identity
        o = jnp.einsum('bnm,bmd->bnd', attn.astype(bf16), vh,
                       preferred_element_type=f32)           # (H*TB, N, hd)

        # Merge heads back to (TB*N, C) and run ONE full-K projection matmul
        # (MXU accumulates over all heads; no (H,N,C) f32 intermediate).
        o = _swap_major_sublane(o.reshape(H, TB * N, hd), "hmd->mhd")
        o = o.reshape(TB * N, C)
        proj = jnp.dot(o.astype(bf16), pw_ref[0],
                       preferred_element_type=f32) + proj_b  # (TB*N, C)

        src = src + proj                                     # residual (drop_path = id)
        src = _layernorm(src, ln1_w, ln1_b)                  # norm1

        # -------------------------- MLP block ------------------------------
        sb = src.astype(bf16)
        hid = jnp.dot(sb, fc1w_ref[0], preferred_element_type=f32) + fc1b_ref[0]
        hid = _gelu_exact(hid)                               # f32
        mlp = jnp.dot(hid.astype(bf16), fc2w_ref[0],
                      preferred_element_type=f32) + fc2_b
        src = src + mlp                                      # residual
        x_state[...] = src

        # --------- final norm + sequence pooling + classifier head ---------
        @pl.when(layer == n_layers - 1)
        def _():
            y = _layernorm(src, nfw_ref[...], nfb_ref[...])  # (TB*N, C)
            # attention_pool: Linear(C, 1) -> softmax over the sequence dim,
            # done per batch element.  pool_w is lane-dense (1, C).
            logit = jnp.sum(y * poolw_ref[...], axis=-1, keepdims=True) + poolb_ref[...]
            logit = logit.reshape(TB, N, 1)
            m = jnp.max(logit, axis=1, keepdims=True)
            e = jnp.exp(logit - m)
            wts = e * _recip(jnp.sum(e, axis=1, keepdims=True))   # (TB, N, 1)
            pooled = jnp.sum(wts * y.reshape(TB, N, C), axis=1)   # (TB, C)
            logits = jnp.dot(pooled.astype(bf16), fcw_ref[...],
                             preferred_element_type=f32) + fcb_ref[...]
            out_ref[...] = logits[:, None, :]                # (TB, 1, num_classes)

    return kernel


# ------------------------------- wrapper ----------------------------------

def _pick_batch_tile(B, max_tile=8):
    t = min(B, max_tile)
    while B % t:
        t -= 1
    return t


def _vmem_limit_bytes():
    # v7x has only 64 MiB VMEM per TensorCore; never request the full physical
    # capacity.  On 128 MiB parts this resolves to 96 MiB (allows a bigger TB).
    try:
        cap = pltpu.get_tpu_info().vmem_capacity_bytes
        return int(min(96 * 1024 * 1024, (cap * 3) // 4))
    except Exception:
        return 48 * 1024 * 1024


def transformer_classifier(x, pos, params, num_heads, num_classes, batch_tile=None):
    B, N, C = x.shape
    assert C % num_heads == 0
    L = params['q_w'].shape[0]
    TB = batch_tile if batch_tile is not None else _pick_batch_tile(B)
    assert B % TB == 0

    kernel = make_kernel(N, C, num_heads, TB)

    def layer_spec(shape):
        nd = len(shape)
        return pl.BlockSpec((1,) + tuple(shape[1:]),
                            lambda b, l, _nd=nd: (l,) + (0,) * (_nd - 1))

    def fixed_spec(shape):
        nd = len(shape)
        return pl.BlockSpec(tuple(shape), lambda b, l, _nd=nd: (0,) * _nd)

    in_specs = [
        pl.BlockSpec((TB, N, C), lambda b, l: (b, 0, 0)),   # x (per batch tile)
        fixed_spec(pos.shape),                              # positional embedding
        layer_spec(params['vecs'].shape),                   # packed LN/bias vectors
        layer_spec(params['q_w'].shape),
        layer_spec(params['k_w'].shape),
        layer_spec(params['v_w'].shape),
        layer_spec(params['proj_w'].shape),
        layer_spec(params['fc1_w'].shape),
        layer_spec(params['fc1_b'].shape),
        layer_spec(params['fc2_w'].shape),
        fixed_spec(params['nf_w'].shape), fixed_spec(params['nf_b'].shape),
        fixed_spec(params['pool_w'].shape), fixed_spec(params['pool_b'].shape),
        fixed_spec(params['fc_w'].shape), fixed_spec(params['fc_b'].shape),
    ]
    out_spec = pl.BlockSpec((TB, 1, num_classes), lambda b, l: (b, 0, 0))

    grid_spec = pltpu.PrefetchScalarGridSpec(
        num_scalar_prefetch=0,
        # batch tiles outer (parallel, shardable across v7x's 2 TensorCores),
        # layers innermost (arbitrary): resident activation scratch is swept
        # through all layers before moving to the next batch tile.
        grid=(B // TB, L),
        in_specs=in_specs,
        out_specs=out_spec,
        scratch_shapes=[pltpu.VMEM((TB * N, C), jnp.float32)],
    )

    out = pl.pallas_call(
        kernel,
        out_shape=jax.ShapeDtypeStruct((B, 1, num_classes), jnp.float32),
        grid_spec=grid_spec,
        compiler_params=pltpu.CompilerParams(
            dimension_semantics=("parallel", "arbitrary"),
            vmem_limit_bytes=_vmem_limit_bytes(),
        ),
    )(x, pos, params['vecs'],
      params['q_w'], params['k_w'], params['v_w'], params['proj_w'],
      params['fc1_w'], params['fc1_b'], params['fc2_w'],
      params['nf_w'], params['nf_b'], params['pool_w'], params['pool_b'],
      params['fc_w'], params['fc_b'])
    return out.reshape(B, num_classes)


# --------------------------- parameter setup -------------------------------

def sinusoidal_embedding(n_channels, dim):
    p = jnp.arange(n_channels, dtype=jnp.float32)[:, None]
    i = jnp.arange(dim)
    denom = jnp.power(10000.0, (2.0 * (i // 2)).astype(jnp.float32) / dim)
    pe = p / denom
    pe = pe.at[:, 0::2].set(jnp.sin(pe[:, 0::2]))
    pe = pe.at[:, 1::2].set(jnp.cos(pe[:, 1::2]))
    return pe[None, :, :]                           # (1, N, C)


def init_params(key, L, C, dff, num_heads, num_classes):
    hd = C // num_heads
    scale = float(hd) ** -0.5
    bf16 = jnp.bfloat16

    def tn(k, shape, std=0.02):
        # trunc_normal_(std=0.02) analogue, deterministic synthetic init
        return std * jax.random.truncated_normal(k, -2.0, 2.0, shape, jnp.float32)

    ks = jax.random.split(key, 8)

    # Packed per-layer (8, C) rows: [lnp_w, lnp_b, proj_b, ln1_w, ln1_b, fc2_b, 0, 0]
    vecs = jnp.zeros((L, 8, C), jnp.float32)
    vecs = vecs.at[:, 0, :].set(1.0)    # pre_norm weight
    vecs = vecs.at[:, 3, :].set(1.0)    # norm1 weight (biases init to 0)

    return dict(
        vecs=vecs,
        # qkv Linear (no bias) split into q/k/v; attention scale folded into q_w.
        q_w=(tn(ks[0], (L, C, C)) * scale).astype(bf16),
        k_w=tn(ks[1], (L, C, C)).astype(bf16),
        v_w=tn(ks[2], (L, C, C)).astype(bf16),
        proj_w=tn(ks[3], (L, C, C)).astype(bf16),
        fc1_w=tn(ks[4], (L, C, dff)).astype(bf16),
        fc1_b=jnp.zeros((L, 1, dff), jnp.float32),
        fc2_w=tn(ks[5], (L, dff, C)).astype(bf16),
        nf_w=jnp.ones((1, C), jnp.float32),
        nf_b=jnp.zeros((1, C), jnp.float32),
        pool_w=tn(ks[6], (1, C)),                   # lane-dense (1, C)
        pool_b=jnp.zeros((1, 1), jnp.float32),
        fc_w=tn(ks[7], (C, num_classes)).astype(bf16),
        fc_b=jnp.zeros((1, num_classes), jnp.float32),
    )


# TODO(synk): Dropout/DropPath are identities at inference; the SOT / plotting
# debug branches (withSOT=True, plot=True, qk=True) and the seq_pool=False
# class-token path are intentionally not implemented.
# TODO(synk): at production sequence lengths, tile the attention over query
# blocks (flash-style) before growing TB further, especially on v7x's 64 MiB
# VMEM; also pad num_classes to a 128-lane width for an unmasked final store.

if __name__ == "__main__":
    B, N, C = 2, 8, 32          # batch, sequence_length, embedding_dim
    H, L = 4, 2                 # num_heads, num_layers
    mlp_ratio = 2.0
    num_classes = 16            # toy config: lane dims < 128, not perf-representative
    dff = int(C * mlp_ratio)

    key = jax.random.PRNGKey(0)
    kx, kp = jax.random.split(key)
    x = jax.random.normal(kx, (B, N, C), jnp.float32)
    params = init_params(kp, L, C, dff, H, num_classes)
    pos = sinusoidal_embedding(N, C)

    out = transformer_classifier(x, pos, params, H, num_classes)
    out = jax.block_until_ready(out)
    assert out.shape == (B, num_classes)
    assert bool(jnp.all(jnp.isfinite(out)))
    print("KERNEL_OK")
</pallas_src>

<mosaic_0001>
module attributes {stable_mosaic.version = 11 : i64} {
  func.func @kernel(%arg0: i32, %arg1: i32, %arg2: memref<2x8x32xf32, #tpu.memory_space<vmem>>, %arg3: memref<1x8x32xf32, #tpu.memory_space<vmem>>, %arg4: memref<1x8x32xf32, #tpu.memory_space<vmem>>, %arg5: memref<1x32x32xbf16, #tpu.memory_space<vmem>>, %arg6: memref<1x32x32xbf16, #tpu.memory_space<vmem>>, %arg7: memref<1x32x32xbf16, #tpu.memory_space<vmem>>, %arg8: memref<1x32x32xbf16, #tpu.memory_space<vmem>>, %arg9: memref<1x32x64xbf16, #tpu.memory_space<vmem>>, %arg10: memref<1x1x64xf32, #tpu.memory_space<vmem>>, %arg11: memref<1x64x32xbf16, #tpu.memory_space<vmem>>, %arg12: memref<1x32xf32, #tpu.memory_space<vmem>>, %arg13: memref<1x32xf32, #tpu.memory_space<vmem>>, %arg14: memref<1x32xf32, #tpu.memory_space<vmem>>, %arg15: memref<1x1xf32, #tpu.memory_space<vmem>>, %arg16: memref<32x16xbf16, #tpu.memory_space<vmem>>, %arg17: memref<1x16xf32, #tpu.memory_space<vmem>>, %arg18: memref<2x1x16xf32, #tpu.memory_space<vmem>>, %arg19: memref<16x32xf32, #tpu.memory_space<vmem>>) attributes {dimension_semantics = [#tpu.dimension_semantics<parallel>, #tpu.dimension_semantics<arbitrary>], iteration_bounds = array<i64: 1, 2>, scalar_prefetch = 0 : i64, scratch_operands = 1 : i64, tpu.core_type = #tpu.core_type<tc>, window_params = [{transform_indices = @transform_0, window_bounds = array<i64: 2, 8, 32>}, {pipeline_mode = #tpu.pipeline_mode<synchronous>, transform_indices = @transform_1, window_bounds = array<i64: 1, 8, 32>}, {transform_indices = @transform_2, window_bounds = array<i64: 1, 8, 32>}, {transform_indices = @transform_3, window_bounds = array<i64: 1, 32, 32>}, {transform_indices = @transform_4, window_bounds = array<i64: 1, 32, 32>}, {transform_indices = @transform_5, window_bounds = array<i64: 1, 32, 32>}, {transform_indices = @transform_6, window_bounds = array<i64: 1, 32, 32>}, {transform_indices = @transform_7, window_bounds = array<i64: 1, 32, 64>}, {transform_indices = @transform_8, window_bounds = array<i64: 1, 1, 64>}, {transform_indices = @transform_9, window_bounds = array<i64: 1, 64, 32>}, {pipeline_mode = #tpu.pipeline_mode<synchronous>, transform_indices = @transform_10, window_bounds = array<i64: 1, 32>}, {pipeline_mode = #tpu.pipeline_mode<synchronous>, transform_indices = @transform_11, window_bounds = array<i64: 1, 32>}, {pipeline_mode = #tpu.pipeline_mode<synchronous>, transform_indices = @transform_12, window_bounds = array<i64: 1, 32>}, {pipeline_mode = #tpu.pipeline_mode<synchronous>, transform_indices = @transform_13, window_bounds = array<i64: 1, 1>}, {pipeline_mode = #tpu.pipeline_mode<synchronous>, transform_indices = @transform_14, window_bounds = array<i64: 32, 16>}, {pipeline_mode = #tpu.pipeline_mode<synchronous>, transform_indices = @transform_15, window_bounds = array<i64: 1, 16>}, {transform_indices = @transform_16, window_bounds = array<i64: 2, 1, 16>}]} {
    %c0_i32 = arith.constant 0 : i32
    %0 = arith.cmpi eq, %arg1, %c0_i32 : i32
    %1 = arith.extui %0 : i1 to i32
    %c0_i32_0 = arith.constant 0 : i32
    %2 = arith.cmpi ne, %1, %c0_i32_0 : i32
    scf.if %2 {
      %c0_51 = arith.constant 0 : index
      %c0_52 = arith.constant 0 : index
      %c0_53 = arith.constant 0 : index
      %128 = vector.load %arg2[%c0_51, %c0_52, %c0_53] : memref<2x8x32xf32, #tpu.memory_space<vmem>>, vector<2x8x32xf32>
      %c0_54 = arith.constant 0 : index
      %c0_55 = arith.constant 0 : index
      %c0_56 = arith.constant 0 : index
      %129 = vector.load %arg3[%c0_54, %c0_55, %c0_56] : memref<1x8x32xf32, #tpu.memory_space<vmem>>, vector<1x8x32xf32>
      %130 = vector.broadcast %129 : vector<1x8x32xf32> to vector<2x8x32xf32>
      %131 = arith.addf %128, %130 : vector<2x8x32xf32>
      %132 = vector.shape_cast %131 : vector<2x8x32xf32> to vector<16x32xf32>
      %c0_57 = arith.constant 0 : index
      %c0_58 = arith.constant 0 : index
      %133 = vector.load %arg19[%c0_57, %c0_58] : memref<16x32xf32, #tpu.memory_space<vmem>>, vector<16x32xf32>
      tpu.vector_store %arg19[%c0_57, %c0_58], %132 {strides = array<i32>} : memref<16x32xf32, #tpu.memory_space<vmem>>, vector<16x32xf32>,
    } else {
    }
    %c0 = arith.constant 0 : index
    %c0_1 = arith.constant 0 : index
    %3 = vector.load %arg19[%c0, %c0_1] : memref<16x32xf32, #tpu.memory_space<vmem>>, vector<16x32xf32>
    %c0_2 = arith.constant 0 : index
    %c0_3 = arith.constant 0 : index
    %c0_4 = arith.constant 0 : index
    %4 = vector.load %arg4[%c0_2, %c0_3, %c0_4] : memref<1x8x32xf32, #tpu.memory_space<vmem>>, vector<1x8x32xf32>
    %5 = vector.shape_cast %4 : vector<1x8x32xf32> to vector<8x32xf32>
    %6 = vector.extract_strided_slice %5 {offsets = [0, 0], sizes = [1, 32], strides = [1, 1]} : vector<8x32xf32> to vector<1x32xf32>
    %7 = vector.extract_strided_slice %5 {offsets = [1, 0], sizes = [1, 32], strides = [1, 1]} : vector<8x32xf32> to vector<1x32xf32>
    %8 = vector.extract_strided_slice %5 {offsets = [2, 0], sizes = [1, 32], strides = [1, 1]} : vector<8x32xf32> to vector<1x32xf32>
    %9 = vector.extract_strided_slice %5 {offsets = [3, 0], sizes = [1, 32], strides = [1, 1]} : vector<8x32xf32> to vector<1x32xf32>
    %10 = vector.extract_strided_slice %5 {offsets = [4, 0], sizes = [1, 32], strides = [1, 1]} : vector<8x32xf32> to vector<1x32xf32>
    %11 = vector.extract_strided_slice %5 {offsets = [5, 0], sizes = [1, 32], strides = [1, 1]} : vector<8x32xf32> to vector<1x32xf32>
    %cst = arith.constant dense<0.000000e+00> : vector<16xf32>
    %12 = vector.multi_reduction <add>, %3, %cst [1] : vector<16x32xf32> to vector<16xf32>
    %13 = vector.shape_cast %12 : vector<16xf32> to vector<16x1xf32>
    %cst_5 = arith.constant 3.200000e+01 : f32
    %14 = vector.broadcast %cst_5 : f32 to vector<16x1xf32>
    %15 = arith.divf %13, %14 : vector<16x1xf32>
    %16 = vector.broadcast %15 : vector<16x1xf32> to vector<16x32xf32>
    %17 = arith.subf %3, %16 : vector<16x32xf32>
    %18 = arith.mulf %17, %17 : vector<16x32xf32>
    %cst_6 = arith.constant dense<0.000000e+00> : vector<16xf32>
    %19 = vector.multi_reduction <add>, %18, %cst_6 [1] : vector<16x32xf32> to vector<16xf32>
    %20 = vector.shape_cast %19 : vector<16xf32> to vector<16x1xf32>
    %cst_7 = arith.constant 3.200000e+01 : f32
    %21 = vector.broadcast %cst_7 : f32 to vector<16x1xf32>
    %22 = arith.divf %20, %21 : vector<16x1xf32>
    %23 = vector.broadcast %15 : vector<16x1xf32> to vector<16x32xf32>
    %24 = arith.subf %3, %23 : vector<16x32xf32>
    %cst_8 = arith.constant 9.99999974E-6 : f32
    %25 = vector.broadcast %cst_8 : f32 to vector<16x1xf32>
    %26 = arith.addf %22, %25 : vector<16x1xf32>
    %27 = math.rsqrt %26 : vector<16x1xf32>
    %28 = vector.broadcast %27 : vector<16x1xf32> to vector<16x32xf32>
    %29 = arith.mulf %24, %28 : vector<16x32xf32>
    %30 = vector.broadcast %6 : vector<1x32xf32> to vector<16x32xf32>
    %31 = arith.mulf %29, %30 : vector<16x32xf32>
    %32 = vector.broadcast %7 : vector<1x32xf32> to vector<16x32xf32>
    %33 = arith.addf %31, %32 : vector<16x32xf32>
    %34 = arith.truncf %33 : vector<16x32xf32> to vector<16x32xbf16>
    %c0_9 = arith.constant 0 : index
    %c0_10 = arith.constant 0 : index
    %c0_11 = arith.constant 0 : index
    %35 = vector.load %arg5[%c0_9, %c0_10, %c0_11] : memref<1x32x32xbf16, #tpu.memory_space<vmem>>, vector<1x32x32xbf16>
    %36 = vector.shape_cast %35 : vector<1x32x32xbf16> to vector<32x32xbf16>
    %cst_12 = arith.constant dense<0.000000e+00> : vector<16x32xf32>
    %37 = tpu.matmul %34, %36, %cst_12 {dimension_numbers = #tpu.dot_dimension_numbers<[1], [0], [0], [1], [0, 0, 1, 1], [], []>} : vector<16x32xbf16>, vector<32x32xbf16>, vector<16x32xf32> -> vector<16x32xf32>
    %c0_13 = arith.constant 0 : index
    %c0_14 = arith.constant 0 : index
    %c0_15 = arith.constant 0 : index
    %38 = vector.load %arg6[%c0_13, %c0_14, %c0_15] : memref<1x32x32xbf16, #tpu.memory_space<vmem>>, vector<1x32x32xbf16>
    %39 = vector.shape_cast %38 : vector<1x32x32xbf16> to vector<32x32xbf16>
    %cst_16 = arith.constant dense<0.000000e+00> : vector<16x32xf32>
    %40 = tpu.matmul %34, %39, %cst_16 {dimension_numbers = #tpu.dot_dimension_numbers<[1], [0], [0], [1], [0, 0, 1, 1], [], []>} : vector<16x32xbf16>, vector<32x32xbf16>, vector<16x32xf32> -> vector<16x32xf32>
    %c0_17 = arith.constant 0 : index
    %c0_18 = arith.constant 0 : index
    %c0_19 = arith.constant 0 : index
    %41 = vector.load %arg7[%c0_17, %c0_18, %c0_19] : memref<1x32x32xbf16, #tpu.memory_space<vmem>>, vector<1x32x32xbf16>
    %42 = vector.shape_cast %41 : vector<1x32x32xbf16> to vector<32x32xbf16>
    %cst_20 = arith.constant dense<0.000000e+00> : vector<16x32xf32>
    %43 = tpu.matmul %34, %42, %cst_20 {dimension_numbers = #tpu.dot_dimension_numbers<[1], [0], [0], [1], [0, 0, 1, 1], [], []>} : vector<16x32xbf16>, vector<32x32xbf16>, vector<16x32xf32> -> vector<16x32xf32>
    %44 = vector.shape_cast %37 : vector<16x32xf32> to vector<16x4x8xf32>
    %45 = tpu.transpose %44, [1, 0, 2] : vector<16x4x8xf32> -> vector<4x16x8xf32>
    %46 = vector.shape_cast %45 : vector<4x16x8xf32> to vector<8x8x8xf32>
    %47 = arith.truncf %46 : vector<8x8x8xf32> to vector<8x8x8xbf16>
    %48 = vector.shape_cast %40 : vector<16x32xf32> to vector<16x4x8xf32>
    %49 = tpu.transpose %48, [1, 0, 2] : vector<16x4x8xf32> -> vector<4x16x8xf32>
    %50 = vector.shape_cast %49 : vector<4x16x8xf32> to vector<8x8x8xf32>
    %51 = arith.truncf %50 : vector<8x8x8xf32> to vector<8x8x8xbf16>
    %52 = vector.shape_cast %43 : vector<16x32xf32> to vector<16x4x8xf32>
    %53 = tpu.transpose %52, [1, 0, 2] : vector<16x4x8xf32> -> vector<4x16x8xf32>
    %54 = vector.shape_cast %53 : vector<4x16x8xf32> to vector<8x8x8xf32>
    %55 = arith.truncf %54 : vector<8x8x8xf32> to vector<8x8x8xbf16>
    "tpu.trace_start"() <{level = 10 : i32, message = "bnd,bmd->bnm"}> : () -> ()
    %cst_21 = arith.constant dense<0.000000e+00> : vector<8x8x8xf32>
    %56 = tpu.matmul %47, %51, %cst_21 {dimension_numbers = #tpu.dot_dimension_numbers<[2], [2], [1], [1], [0, 0, 0, 1, 1, 1], [0], [0]>} : vector<8x8x8xbf16>, vector<8x8x8xbf16>, vector<8x8x8xf32> -> vector<8x8x8xf32>
    "tpu.trace_stop"() : () -> ()
    %cst_22 = arith.constant dense<0xFF800000> : vector<8x8xf32>
    %57 = vector.multi_reduction <maximumf>, %56, %cst_22 [2] : vector<8x8x8xf32> to vector<8x8xf32>
    %58 = vector.shape_cast %57 : vector<8x8xf32> to vector<8x8x1xf32>
    %59 = vector.broadcast %58 : vector<8x8x1xf32> to vector<8x8x8xf32>
    %60 = arith.subf %56, %59 : vector<8x8x8xf32>
    %61 = math.exp %60 : vector<8x8x8xf32>
    %cst_23 = arith.constant dense<0.000000e+00> : vector<8x8xf32>
    %62 = vector.multi_reduction <add>, %61, %cst_23 [2] : vector<8x8x8xf32> to vector<8x8xf32>
    %63 = vector.shape_cast %62 : vector<8x8xf32> to vector<8x8x1xf32>
    %64 = tpu.reciprocal %63 {approx = true} : vector<8x8x1xf32> -> vector<8x8x1xf32>
    %65 = vector.broadcast %64 : vector<8x8x1xf32> to vector<8x8x8xf32>
    %66 = arith.mulf %61, %65 : vector<8x8x8xf32>
    %67 = arith.truncf %66 : vector<8x8x8xf32> to vector<8x8x8xbf16>
    "tpu.trace_start"() <{level = 10 : i32, message = "bnm,bmd->bnd"}> : () -> ()
    %cst_24 = arith.constant dense<0.000000e+00> : vector<8x8x8xf32>
    %68 = tpu.matmul %67, %55, %cst_24 {dimension_numbers = #tpu.dot_dimension_numbers<[2], [1], [1], [2], [0, 0, 0, 1, 1, 2], [0], [0]>} : vector<8x8x8xbf16>, vector<8x8x8xbf16>, vector<8x8x8xf32> -> vector<8x8x8xf32>
    "tpu.trace_stop"() : () -> ()
    %69 = vector.shape_cast %68 : vector<8x8x8xf32> to vector<4x16x8xf32>
    %70 = tpu.transpose %69, [1, 0, 2] : vector<4x16x8xf32> -> vector<16x4x8xf32>
    %71 = vector.shape_cast %70 : vector<16x4x8xf32> to vector<16x32xf32>
    %72 = arith.truncf %71 : vector<16x32xf32> to vector<16x32xbf16>
    %c0_25 = arith.constant 0 : index
    %c0_26 = arith.constant 0 : index
    %c0_27 = arith.constant 0 : index
    %73 = vector.load %arg8[%c0_25, %c0_26, %c0_27] : memref<1x32x32xbf16, #tpu.memory_space<vmem>>, vector<1x32x32xbf16>
    %74 = vector.shape_cast %73 : vector<1x32x32xbf16> to vector<32x32xbf16>
    %cst_28 = arith.constant dense<0.000000e+00> : vector<16x32xf32>
    %75 = tpu.matmul %72, %74, %cst_28 {dimension_numbers = #tpu.dot_dimension_numbers<[1], [0], [0], [1], [0, 0, 1, 1], [], []>} : vector<16x32xbf16>, vector<32x32xbf16>, vector<16x32xf32> -> vector<16x32xf32>
    %76 = vector.broadcast %8 : vector<1x32xf32> to vector<16x32xf32>
    %77 = arith.addf %75, %76 : vector<16x32xf32>
    %78 = arith.addf %3, %77 : vector<16x32xf32>
    %cst_29 = arith.constant dense<0.000000e+00> : vector<16xf32>
    %79 = vector.multi_reduction <add>, %78, %cst_29 [1] : vector<16x32xf32> to vector<16xf32>
    %80 = vector.shape_cast %79 : vector<16xf32> to vector<16x1xf32>
    %cst_30 = arith.constant 3.200000e+01 : f32
    %81 = vector.broadcast %cst_30 : f32 to vector<16x1xf32>
    %82 = arith.divf %80, %81 : vector<16x1xf32>
    %83 = vector.broadcast %82 : vector<16x1xf32> to vector<16x32xf32>
    %84 = arith.subf %78, %83 : vector<16x32xf32>
    %85 = arith.mulf %84, %84 : vector<16x32xf32>
    %cst_31 = arith.constant dense<0.000000e+00> : vector<16xf32>
    %86 = vector.multi_reduction <add>, %85, %cst_31 [1] : vector<16x32xf32> to vector<16xf32>
    %87 = vector.shape_cast %86 : vector<16xf32> to vector<16x1xf32>
    %cst_32 = arith.constant 3.200000e+01 : f32
    %88 = vector.broadcast %cst_32 : f32 to vector<16x1xf32>
    %89 = arith.divf %87, %88 : vector<16x1xf32>
    %90 = vector.broadcast %82 : vector<16x1xf32> to vector<16x32xf32>
    %91 = arith.subf %78, %90 : vector<16x32xf32>
    %cst_33 = arith.constant 9.99999974E-6 : f32
    %92 = vector.broadcast %cst_33 : f32 to vector<16x1xf32>
    %93 = arith.addf %89, %92 : vector<16x1xf32>
    %94 = math.rsqrt %93 : vector<16x1xf32>
    %95 = vector.broadcast %94 : vector<16x1xf32> to vector<16x32xf32>
    %96 = arith.mulf %91, %95 : vector<16x32xf32>
    %97 = vector.broadcast %9 : vector<1x32xf32> to vector<16x32xf32>
    %98 = arith.mulf %96, %97 : vector<16x32xf32>
    %99 = vector.broadcast %10 : vector<1x32xf32> to vector<16x32xf32>
    %100 = arith.addf %98, %99 : vector<16x32xf32>
    %101 = arith.truncf %100 : vector<16x32xf32> to vector<16x32xbf16>
    %c0_34 = arith.constant 0 : index
    %c0_35 = arith.constant 0 : index
    %c0_36 = arith.constant 0 : index
    %102 = vector.load %arg9[%c0_34, %c0_35, %c0_36] : memref<1x32x64xbf16, #tpu.memory_space<vmem>>, vector<1x32x64xbf16>
    %103 = vector.shape_cast %102 : vector<1x32x64xbf16> to vector<32x64xbf16>
    %cst_37 = arith.constant dense<0.000000e+00> : vector<16x64xf32>
    %104 = tpu.matmul %101, %103, %cst_37 {dimension_numbers = #tpu.dot_dimension_numbers<[1], [0], [0], [1], [0, 0, 1, 1], [], []>} : vector<16x32xbf16>, vector<32x64xbf16>, vector<16x64xf32> -> vector<16x64xf32>
    %c0_38 = arith.constant 0 : index
    %c0_39 = arith.constant 0 : index
    %c0_40 = arith.constant 0 : index
    %105 = vector.load %arg10[%c0_38, %c0_39, %c0_40] : memref<1x1x64xf32, #tpu.memory_space<vmem>>, vector<1x1x64xf32>
    %106 = vector.shape_cast %105 : vector<1x1x64xf32> to vector<1x64xf32>
    %107 = vector.broadcast %106 : vector<1x64xf32> to vector<16x64xf32>
    %108 = arith.addf %104, %107 : vector<16x64xf32>
    %cst_41 = arith.constant 5.000000e-01 : f32
    %109 = vector.broadcast %cst_41 : f32 to vector<16x64xf32>
    %110 = arith.mulf %109, %108 : vector<16x64xf32>
    %cst_42 = arith.constant 0.707106769 : f32
    %111 = vector.broadcast %cst_42 : f32 to vector<16x64xf32>
    %112 = arith.mulf %108, %111 : vector<16x64xf32>
    %113 = math.erf %112 : vector<16x64xf32>
    %cst_43 = arith.constant 1.000000e+00 : f32
    %114 = vector.broadcast %cst_43 : f32 to vector<16x64xf32>
    %115 = arith.addf %114, %113 : vector<16x64xf32>
    %116 = arith.mulf %110, %115 : vector<16x64xf32>
    %117 = arith.truncf %116 : vector<16x64xf32> to vector<16x64xbf16>
    %c0_44 = arith.constant 0 : index
    %c0_45 = arith.constant 0 : index
    %c0_46 = arith.constant 0 : index
    %118 = vector.load %arg11[%c0_44, %c0_45, %c0_46] : memref<1x64x32xbf16, #tpu.memory_space<vmem>>, vector<1x64x32xbf16>
    %119 = vector.shape_cast %118 : vector<1x64x32xbf16> to vector<64x32xbf16>
    %cst_47 = arith.constant dense<0.000000e+00> : vector<16x32xf32>
    %120 = tpu.matmul %117, %119, %cst_47 {dimension_numbers = #tpu.dot_dimension_numbers<[1], [0], [0], [1], [0, 0, 1, 1], [], []>} : vector<16x64xbf16>, vector<64x32xbf16>, vector<16x32xf32> -> vector<16x32xf32>
    %121 = vector.broadcast %11 : vector<1x32xf32> to vector<16x32xf32>
    %122 = arith.addf %120, %121 : vector<16x32xf32>
    %123 = arith.addf %100, %122 : vector<16x32xf32>
    %c0_48 = arith.constant 0 : index
    %c0_49 = arith.constant 0 : index
    %124 = vector.load %arg19[%c0_48, %c0_49] : memref<16x32xf32, #tpu.memory_space<vmem>>, vector<16x32xf32>
    tpu.vector_store %arg19[%c0_48, %c0_49], %123 {strides = array<i32>} : memref<16x32xf32, #tpu.memory_space<vmem>>, vector<16x32xf32>,
    %c1_i32 = arith.constant 1 : i32
    %125 = arith.cmpi eq, %arg1, %c1_i32 : i32
    %126 = arith.extui %125 : i1 to i32
    %c0_i32_50 = arith.constant 0 : i32
    %127 = arith.cmpi ne, %126, %c0_i32_50 : i32
    scf.if %127 {
      %c0_51 = arith.constant 0 : index
      %c0_52 = arith.constant 0 : index
      %128 = vector.load %arg12[%c0_51, %c0_52] : memref<1x32xf32, #tpu.memory_space<vmem>>, vector<1x32xf32>
      %c0_53 = arith.constant 0 : index
      %c0_54 = arith.constant 0 : index
      %129 = vector.load %arg13[%c0_53, %c0_54] : memref<1x32xf32, #tpu.memory_space<vmem>>, vector<1x32xf32>
      %cst_55 = arith.constant dense<0.000000e+00> : vector<16xf32>
      %130 = vector.multi_reduction <add>, %123, %cst_55 [1] : vector<16x32xf32> to vector<16xf32>
      %131 = vector.shape_cast %130 : vector<16xf32> to vector<16x1xf32>
      %cst_56 = arith.constant 3.200000e+01 : f32
      %132 = vector.broadcast %cst_56 : f32 to vector<16x1xf32>
      %133 = arith.divf %131, %132 : vector<16x1xf32>
      %134 = vector.broadcast %133 : vector<16x1xf32> to vector<16x32xf32>
      %135 = arith.subf %123, %134 : vector<16x32xf32>
      %136 = arith.mulf %135, %135 : vector<16x32xf32>
      %cst_57 = arith.constant dense<0.000000e+00> : vector<16xf32>
      %137 = vector.multi_reduction <add>, %136, %cst_57 [1] : vector<16x32xf32> to vector<16xf32>
      %138 = vector.shape_cast %137 : vector<16xf32> to vector<16x1xf32>
      %cst_58 = arith.constant 3.200000e+01 : f32
      %139 = vector.broadcast %cst_58 : f32 to vector<16x1xf32>
      %140 = arith.divf %138, %139 : vector<16x1xf32>
      %141 = vector.broadcast %133 : vector<16x1xf32> to vector<16x32xf32>
      %142 = arith.subf %123, %141 : vector<16x32xf32>
      %cst_59 = arith.constant 9.99999974E-6 : f32
      %143 = vector.broadcast %cst_59 : f32 to vector<16x1xf32>
      %144 = arith.addf %140, %143 : vector<16x1xf32>
      %145 = math.rsqrt %144 : vector<16x1xf32>
      %146 = vector.broadcast %145 : vector<16x1xf32> to vector<16x32xf32>
      %147 = arith.mulf %142, %146 : vector<16x32xf32>
      %148 = vector.broadcast %128 : vector<1x32xf32> to vector<16x32xf32>
      %149 = arith.mulf %147, %148 : vector<16x32xf32>
      %150 = vector.broadcast %129 : vector<1x32xf32> to vector<16x32xf32>
      %151 = arith.addf %149, %150 : vector<16x32xf32>
      %c0_60 = arith.constant 0 : index
      %c0_61 = arith.constant 0 : index
      %152 = vector.load %arg14[%c0_60, %c0_61] : memref<1x32xf32, #tpu.memory_space<vmem>>, vector<1x32xf32>
      %153 = vector.broadcast %152 : vector<1x32xf32> to vector<16x32xf32>
      %154 = arith.mulf %151, %153 : vector<16x32xf32>
      %cst_62 = arith.constant dense<0.000000e+00> : vector<16xf32>
      %155 = vector.multi_reduction <add>, %154, %cst_62 [1] : vector<16x32xf32> to vector<16xf32>
      %156 = vector.shape_cast %155 : vector<16xf32> to vector<16x1xf32>
      %c0_63 = arith.constant 0 : index
      %c0_64 = arith.constant 0 : index
      %157 = vector.load %arg15[%c0_63, %c0_64] : memref<1x1xf32, #tpu.memory_space<vmem>>, vector<1x1xf32>
      %158 = vector.broadcast %157 : vector<1x1xf32> to vector<16x1xf32>
      %159 = arith.addf %156, %158 : vector<16x1xf32>
      %160 = vector.shape_cast %159 : vector<16x1xf32> to vector<2x8x1xf32>
      %cst_65 = arith.constant dense<0xFF800000> : vector<2x1xf32>
      %161 = vector.multi_reduction <maximumf>, %160, %cst_65 [1] : vector<2x8x1xf32> to vector<2x1xf32>
      %162 = vector.shape_cast %161 : vector<2x1xf32> to vector<2x1x1xf32>
      %163 = vector.broadcast %162 : vector<2x1x1xf32> to vector<2x8x1xf32>
      %164 = arith.subf %160, %163 : vector<2x8x1xf32>
      %165 = math.exp %164 : vector<2x8x1xf32>
      %cst_66 = arith.constant dense<0.000000e+00> : vector<2x1xf32>
      %166 = vector.multi_reduction <add>, %165, %cst_66 [1] : vector<2x8x1xf32> to vector<2x1xf32>
      %167 = vector.shape_cast %166 : vector<2x1xf32> to vector<2x1x1xf32>
      %168 = tpu.reciprocal %167 {approx = true} : vector<2x1x1xf32> -> vector<2x1x1xf32>
      %169 = vector.broadcast %168 : vector<2x1x1xf32> to vector<2x8x1xf32>
      %170 = arith.mulf %165, %169 : vector<2x8x1xf32>
      %171 = vector.shape_cast %151 : vector<16x32xf32> to vector<2x8x32xf32>
      %172 = vector.broadcast %170 : vector<2x8x1xf32> to vector<2x8x32xf32>
      %173 = arith.mulf %172, %171 : vector<2x8x32xf32>
      %cst_67 = arith.constant dense<0.000000e+00> : vector<2x32xf32>
      %174 = vector.multi_reduction <add>, %173, %cst_67 [1] : vector<2x8x32xf32> to vector<2x32xf32>
      %175 = arith.truncf %174 : vector<2x32xf32> to vector<2x32xbf16>
      %c0_68 = arith.constant 0 : index
      %c0_69 = arith.constant 0 : index
      %176 = vector.load %arg16[%c0_68, %c0_69] : memref<32x16xbf16, #tpu.memory_space<vmem>>, vector<32x16xbf16>
      %cst_70 = arith.constant dense<0.000000e+00> : vector<2x16xf32>
      %177 = tpu.matmul %175, %176, %cst_70 {dimension_numbers = #tpu.dot_dimension_numbers<[1], [0], [0], [1], [0, 0, 1, 1], [], []>} : vector<2x32xbf16>, vector<32x16xbf16>, vector<2x16xf32> -> vector<2x16xf32>
      %c0_71 = arith.constant 0 : index
      %c0_72 = arith.constant 0 : index
      %178 = vector.load %arg17[%c0_71, %c0_72] : memref<1x16xf32, #tpu.memory_space<vmem>>, vector<1x16xf32>
      %179 = vector.broadcast %178 : vector<1x16xf32> to vector<2x16xf32>
      %180 = arith.addf %177, %179 : vector<2x16xf32>
      %181 = vector.shape_cast %180 : vector<2x16xf32> to vector<2x1x16xf32>
      %c0_73 = arith.constant 0 : index
      %c0_74 = arith.constant 0 : index
      %c0_75 = arith.constant 0 : index
      %182 = vector.load %arg18[%c0_73, %c0_74, %c0_75] : memref<2x1x16xf32, #tpu.memory_space<vmem>>, vector<2x1x16xf32>
      tpu.vector_store %arg18[%c0_73, %c0_74, %c0_75], %181 {strides = array<i32>} : memref<2x1x16xf32, #tpu.memory_space<vmem>>, vector<2x1x16xf32>,
    } else {
    }
    return
  }
  func.func @transform_0(%arg0: i32, %arg1: i32) -> (i32, i32, i32) {
    %c0_i32 = arith.constant 0 : i32
    %c0_i32_0 = arith.constant 0 : i32
    %c0_i32_1 = arith.constant 0 : i32
    return %arg0, %c0_i32, %c0_i32_0 : i32, i32, i32
  }
  func.func @transform_1(%arg0: i32, %arg1: i32) -> (i32, i32, i32) {
    %c0_i32 = arith.constant 0 : i32
    %c0_i32_0 = arith.constant 0 : i32
    %c0_i32_1 = arith.constant 0 : i32
    %c0_i32_2 = arith.constant 0 : i32
    return %c0_i32, %c0_i32_0, %c0_i32_1 : i32, i32, i32
  }
  func.func @transform_2(%arg0: i32, %arg1: i32) -> (i32, i32, i32) {
    %c0_i32 = arith.constant 0 : i32
    %c0_i32_0 = arith.constant 0 : i32
    %c0_i32_1 = arith.constant 0 : i32
    return %arg1, %c0_i32, %c0_i32_0 : i32, i32, i32
  }
  func.func @transform_3(%arg0: i32, %arg1: i32) -> (i32, i32, i32) {
    %c0_i32 = arith.constant 0 : i32
    %c0_i32_0 = arith.constant 0 : i32
    %c0_i32_1 = arith.constant 0 : i32
    return %arg1, %c0_i32, %c0_i32_0 : i32, i32, i32
  }
  func.func @transform_4(%arg0: i32, %arg1: i32) -> (i32, i32, i32) {
    %c0_i32 = arith.constant 0 : i32
    %c0_i32_0 = arith.constant 0 : i32
    %c0_i32_1 = arith.constant 0 : i32
    return %arg1, %c0_i32, %c0_i32_0 : i32, i32, i32
  }
  func.func @transform_5(%arg0: i32, %arg1: i32) -> (i32, i32, i32) {
    %c0_i32 = arith.constant 0 : i32
    %c0_i32_0 = arith.constant 0 : i32
    %c0_i32_1 = arith.constant 0 : i32
    return %arg1, %c0_i32, %c0_i32_0 : i32, i32, i32
  }
  func.func @transform_6(%arg0: i32, %arg1: i32) -> (i32, i32, i32) {
    %c0_i32 = arith.constant 0 : i32
    %c0_i32_0 = arith.constant 0 : i32
    %c0_i32_1 = arith.constant 0 : i32
    return %arg1, %c0_i32, %c0_i32_0 : i32, i32, i32
  }
  func.func @transform_7(%arg0: i32, %arg1: i32) -> (i32, i32, i32) {
    %c0_i32 = arith.constant 0 : i32
    %c0_i32_0 = arith.constant 0 : i32
    %c0_i32_1 = arith.constant 0 : i32
    return %arg1, %c0_i32, %c0_i32_0 : i32, i32, i32
  }
  func.func @transform_8(%arg0: i32, %arg1: i32) -> (i32, i32, i32) {
    %c0_i32 = arith.constant 0 : i32
    %c0_i32_0 = arith.constant 0 : i32
    %c0_i32_1 = arith.constant 0 : i32
    return %arg1, %c0_i32, %c0_i32_0 : i32, i32, i32
  }
  func.func @transform_9(%arg0: i32, %arg1: i32) -> (i32, i32, i32) {
    %c0_i32 = arith.constant 0 : i32
    %c0_i32_0 = arith.constant 0 : i32
    %c0_i32_1 = arith.constant 0 : i32
    return %arg1, %c0_i32, %c0_i32_0 : i32, i32, i32
  }
  func.func @transform_10(%arg0: i32, %arg1: i32) -> (i32, i32) {
    %c0_i32 = arith.constant 0 : i32
    %c0_i32_0 = arith.constant 0 : i32
    %c0_i32_1 = arith.constant 0 : i32
    return %c0_i32, %c0_i32_0 : i32, i32
  }
  func.func @transform_11(%arg0: i32, %arg1: i32) -> (i32, i32) {
    %c0_i32 = arith.constant 0 : i32
    %c0_i32_0 = arith.constant 0 : i32
    %c0_i32_1 = arith.constant 0 : i32
    return %c0_i32, %c0_i32_0 : i32, i32
  }
  func.func @transform_12(%arg0: i32, %arg1: i32) -> (i32, i32) {
    %c0_i32 = arith.constant 0 : i32
    %c0_i32_0 = arith.constant 0 : i32
    %c0_i32_1 = arith.constant 0 : i32
    return %c0_i32, %c0_i32_0 : i32, i32
  }
  func.func @transform_13(%arg0: i32, %arg1: i32) -> (i32, i32) {
    %c0_i32 = arith.constant 0 : i32
    %c0_i32_0 = arith.constant 0 : i32
    %c0_i32_1 = arith.constant 0 : i32
    return %c0_i32, %c0_i32_0 : i32, i32
  }
  func.func @transform_14(%arg0: i32, %arg1: i32) -> (i32, i32) {
    %c0_i32 = arith.constant 0 : i32
    %c0_i32_0 = arith.constant 0 : i32
    %c0_i32_1 = arith.constant 0 : i32
    return %c0_i32, %c0_i32_0 : i32, i32
  }
  func.func @transform_15(%arg0: i32, %arg1: i32) -> (i32, i32) {
    %c0_i32 = arith.constant 0 : i32
    %c0_i32_0 = arith.constant 0 : i32
    %c0_i32_1 = arith.constant 0 : i32
    return %c0_i32, %c0_i32_0 : i32, i32
  }
  func.func @transform_16(%arg0: i32, %arg1: i32) -> (i32, i32, i32) {
    %c0_i32 = arith.constant 0 : i32
    %c0_i32_0 = arith.constant 0 : i32
    %c0_i32_1 = arith.constant 0 : i32
    return %arg0, %c0_i32, %c0_i32_0 : i32, i32, i32
  }
}

</mosaic_0001>

<llo_original>
// kernel: tpu_custom_call.1
$region0: #{tpu_custom_call.1}
  #allocation0 [shape = 'u32[]', space=smem, size = 0x4, offset = 0x4, fixed_abs, tag = 'smem constant byte address 0x4 - core index']
  #allocation1 [shape = 'u32[72,128]{1,0:T(1,128)}', space=vmem, size = 0x9000, scoped, tag = 'internal scratch']
  #allocation2 [shape = 'f32[16,32]{1,0:T(8,128)}', space=vmem, size = 0x2000, scoped, tag = 'scratch operand']
  #allocation3 [shape = 'f32[1,1]{1,0:T(1,128)S(1)}', space=vmem, size = 0x200, scoped, tag = 'scoped memory for tpu_custom_call.1']
  %s0 = inlined_call_operand.hbm [shape: f32[2,8,32], index: 0, kind: input, shape index: {}]
  %s1 = inlined_call_operand.hbm [shape: f32[1,8,32], index: 1, kind: input, shape index: {}]
  %s2 = inlined_call_operand.hbm [shape: f32[2,8,32], index: 2, kind: input, shape index: {}]
  %s3 = inlined_call_operand.vmem [shape: bf16[2,32,32], index: 3, kind: input, shape index: {}]
  %s4 = inlined_call_operand.vmem [shape: bf16[2,32,32], index: 4, kind: input, shape index: {}]
  %s5 = inlined_call_operand.vmem [shape: bf16[2,32,32], index: 5, kind: input, shape index: {}]
  %s6 = inlined_call_operand.hbm [shape: bf16[2,32,32], index: 6, kind: input, shape index: {}]
  %s7 = inlined_call_operand.hbm [shape: bf16[2,32,64], index: 7, kind: input, shape index: {}]
  %s8 = inlined_call_operand.vmem [shape: f32[2,1,64], index: 8, kind: input, shape index: {}]
  %s9 = inlined_call_operand.vmem [shape: bf16[2,64,32], index: 9, kind: input, shape index: {}]
  %s10 = inlined_call_operand.vmem [shape: f32[1,32], index: 10, kind: input, shape index: {}]
  %s11 = inlined_call_operand.hbm [shape: f32[1,32], index: 11, kind: input, shape index: {}]
  %s12 = inlined_call_operand.vmem [shape: f32[1,32], index: 12, kind: input, shape index: {}]
  %s13 = inlined_call_operand.<no memory space> [shape: f32[1,1], index: 13, kind: input, shape index: {}]
  %s14 = inlined_call_operand.vmem [shape: bf16[32,16], index: 14, kind: input, shape index: {}]
  %s15 = inlined_call_operand.vmem [shape: f32[1,16], index: 15, kind: input, shape index: {}]
  %s16 = inlined_call_operand.hbm [shape: f32[2,1,16], index: 16, kind: output, shape index: {}]
  %s17 = sld [smem:[#allocation0]]
  $region129: #{tpu_custom_call.1} parent=0
    _
  %s19 = ssub.s32 1, %s17
  %s20 = scalar_select 0, %s19, %s17
  %v21 = vstv %s13
  %22 = vst [vmem:[#allocation3] sm:$0x1] %v21
  $region1: #{tpu_custom_call.1} parent=0
    #allocation4 [shape = 'u8[8192]{0}', space=vmem, size = 0x2000, scoped, tag = 'input window, operand 0, single buffered']
    #allocation5 [shape = 's32[2]{0}', space=sflag, size = 0x8, scoped, tag = 'scoped memory for tpu_custom_call.1']
    #allocation6 [shape = 's32[2]{0}', space=sflag, size = 0x8, scoped, tag = 'scoped memory for tpu_custom_call.1']
    #allocation7 [shape = 'u8[4096]{0}', space=vmem, size = 0x1000, scoped, tag = 'input window, operand 1, single buffered']
    #allocation8 [shape = 's32[1]{0}', space=sflag, size = 0x4, scoped, tag = 'scoped memory for tpu_custom_call.1']
    #allocation9 [shape = 'u8[8192]{0}', space=vmem, size = 0x2000, scoped, tag = 'input window, operand 2']
    #allocation10 [shape = 'u8[16384]{0}', space=vmem, size = 0x4000, scoped, tag = 'input window, operand 6']
    #allocation11 [shape = 'u8[16384]{0}', space=vmem, size = 0x4000, scoped, tag = 'input window, operand 7']
    #allocation12 [shape = 'u8[512]{0}', space=vmem, size = 0x400, scoped, tag = 'input window, operand 11, single buffered']
    #allocation13 [shape = 'u8[1024]{0}', space=vmem, size = 0x400, scoped, tag = 'output window, operand 0, single buffered']
    %23 = vsyncpa [#allocation5], 0
    %24 = vsyncpa [#allocation8], 0
    %25 = vsyncpa [#allocation6], 0
    loop: start=0, step=1, limit=4
    $region2: #{tpu_custom_call.1} parent=1 // loop_pre_header
      _
    $region3: #{tpu_custom_call.1} parent=1 // loop_header
      %s27 = sphi 0, %s31
      %p28 = scmp.ge.s32.totalorder %s27, 4
      %s34 = sphi 0, %s46
      %s35 = sphi 0, %s42
      %s36 = sphi 0, %s34
      %s37 = sphi 0, %s35
      %s38 = sphi 0, %s36
      %s39 = sphi 0, %s37
      %s49 = sphi 0, %s51
      %s52 = sphi 0, %s49
      %s53 = sphi 0, %s52
      %s69 = sphi 0, %s53
      %s73 = sphi 0, %s73
      %s75 = sphi 0, %s73
      %s76 = sphi 0, %s75
      %s90 = sphi 0, %s76
      %s96 = sphi 0, %s98
      %s99 = sphi 0, %s96
      %s100 = sphi 0, %s99
      %s116 = sphi 0, %s100
      %s122 = sphi 0, %s124
      %s125 = sphi 0, %s122
      %s126 = sphi 0, %s125
      %s142 = sphi 0, %s126
      %s148 = sphi 0, %s150
      %s151 = sphi 0, %s148
      %s152 = sphi 0, %s151
      %s168 = sphi 0, %s152
      %s174 = sphi 0, %s176
      %s177 = sphi 0, %s174
      %s178 = sphi 0, %s177
      %s194 = sphi 0, %s178
      %s200 = sphi 0, %s202
      %s203 = sphi 0, %s200
      %s204 = sphi 0, %s203
      %s220 = sphi 0, %s204
      %s226 = sphi 0, %s228
      %s229 = sphi 0, %s226
      %s230 = sphi 0, %s229
      %s246 = sphi 0, %s230
      %s252 = sphi 0, %s254
      %s255 = sphi 0, %s252
      %s256 = sphi 0, %s255
      %s272 = sphi 0, %s256
      %s278 = sphi 0, %s280
      %s281 = sphi 0, %s278
      %s282 = sphi 0, %s281
      %s298 = sphi 0, %s282
      %s302 = sphi 0, %s302
      %s304 = sphi 0, %s302
      %s305 = sphi 0, %s304
      %s319 = sphi 0, %s305
      %s323 = sphi 0, %s323
      %s325 = sphi 0, %s323
      %s326 = sphi 0, %s325
      %s340 = sphi 0, %s326
      %s344 = sphi 0, %s344
      %s346 = sphi 0, %s344
      %s347 = sphi 0, %s346
      %s361 = sphi 0, %s347
      %s365 = sphi 0, %s365
      %s367 = sphi 0, %s365
      %s368 = sphi 0, %s367
      %s382 = sphi 0, %s368
      %s386 = sphi 0, %s386
      %s388 = sphi 0, %s386
      %s389 = sphi 0, %s388
      %s403 = sphi 0, %s389
      %s407 = sphi 0, %s407
      %s409 = sphi 0, %s407
      %s410 = sphi 0, %s409
      %s424 = sphi 0, %s410
      %s430 = sphi 0, %s432
      %s433 = sphi 0, %s430
      %s434 = sphi 0, %s433
      %s450 = sphi 0, %s434
    $region4: #{tpu_custom_call.1} parent=1 // loop_header_branch
      %30 = sbr.rel (%p28) target = $region8
    $region5: #{tpu_custom_call.1} parent=1 // loop_body
      %s32 = ssub.s32 %s27, 1
      %s33 = ssub.s32 %s27, 2
      %s40 = sadd.s32 1, %s35
      %p41 = scmp.ge.s32.totalorder %s40, 2
      %s42 = scalar_select %p41, 0, %s40
      %s43 = sadd.s32 1, %s34
      %s44 = scalar_select %p41, %s43, %s34
      %p45 = scmp.ge.s32.totalorder %s44, 1
      %s46 = scalar_select %p45, 0, %s44
      %s47 = ssub.s32 %s34, %s46
      %p48 = scmp.eq.s32.totalorder %s47, 0
      %s50 = sadd.s32 %s49, 1
      %s51 = scalar_select %p48, %s49, %s50
      %p54 = pneg %p48
      %p55 = scmp.eq.s32.totalorder %s27, 1
      %p56 = por %p54, %p55
      %p57 = scmp.ne.s32.totalorder %s49, %s52
      %p58 = scmp.eq.s32.totalorder %s27, 0
      %p59 = por %p57, %p58
      %p60 = scmp.ne.s32.totalorder %s49, %s52
      %p61 = scmp.eq.s32.totalorder %s32, 1
      %p62 = por %p60, %p61
      %p63 = scmp.ne.s32.totalorder %s52, %s53
      %p64 = scmp.eq.s32.totalorder %s32, 0
      %p65 = por %p63, %p64
      %p66 = scmp.ne.s32.totalorder %s52, %s53
      %p67 = scmp.eq.s32.totalorder %s33, 1
      %p68 = por %p66, %p67
      %p70 = scmp.ne.s32.totalorder %s53, %s69
      %p71 = scmp.eq.s32.totalorder %s33, 0
      %p72 = por %p70, %p71
      %s74 = sadd.s32 %s73, 1
      %p77 = scmp.eq.s32.totalorder %s27, 1
      %p78 = scmp.ne.s32.totalorder %s73, %s75
      %p79 = scmp.eq.s32.totalorder %s27, 0
      %p80 = por %p78, %p79
      %p81 = scmp.ne.s32.totalorder %s73, %s75
      %p82 = scmp.eq.s32.totalorder %s32, 1
      %p83 = por %p81, %p82
      %p84 = scmp.ne.s32.totalorder %s75, %s76
      %p85 = scmp.eq.s32.totalorder %s32, 0
      %p86 = por %p84, %p85
      %p87 = scmp.ne.s32.totalorder %s75, %s76
      %p88 = scmp.eq.s32.totalorder %s33, 1
      %p89 = por %p87, %p88
      %p91 = scmp.ne.s32.totalorder %s76, %s90
      %p92 = scmp.eq.s32.totalorder %s33, 0
      %p93 = por %p91, %p92
      %s94 = ssub.s32 %s35, %s42
      %p95 = scmp.eq.s32.totalorder %s94, 0
      %s97 = sadd.s32 %s96, 1
      %s98 = scalar_select %p95, %s96, %s97
      %p101 = pneg %p95
      %p102 = scmp.eq.s32.totalorder %s27, 1
      %p103 = por %p101, %p102
      %p104 = scmp.ne.s32.totalorder %s96, %s99
      %p105 = scmp.eq.s32.totalorder %s27, 0
      %p106 = por %p104, %p105
      %p107 = scmp.ne.s32.totalorder %s96, %s99
      %p108 = scmp.eq.s32.totalorder %s32, 1
      %p109 = por %p107, %p108
      %p110 = scmp.ne.s32.totalorder %s99, %s100
      %p111 = scmp.eq.s32.totalorder %s32, 0
      %p112 = por %p110, %p111
      %p113 = scmp.ne.s32.totalorder %s99, %s100
      %p114 = scmp.eq.s32.totalorder %s33, 1
      %p115 = por %p113, %p114
      %p117 = scmp.ne.s32.totalorder %s100, %s116
      %p118 = scmp.eq.s32.totalorder %s33, 0
      %p119 = por %p117, %p118
      %s120 = ssub.s32 %s35, %s42
      %p121 = scmp.eq.s32.totalorder %s120, 0
      %s123 = sadd.s32 %s122, 1
      %s124 = scalar_select %p121, %s122, %s123
      %p127 = pneg %p121
      %p128 = scmp.eq.s32.totalorder %s27, 1
      %p129 = por %p127, %p128
      %p130 = scmp.ne.s32.totalorder %s122, %s125
      %p131 = scmp.eq.s32.totalorder %s27, 0
      %p132 = por %p130, %p131
      %p133 = scmp.ne.s32.totalorder %s122, %s125
      %p134 = scmp.eq.s32.totalorder %s32, 1
      %p135 = por %p133, %p134
      %p136 = scmp.ne.s32.totalorder %s125, %s126
      %p137 = scmp.eq.s32.totalorder %s32, 0
      %p138 = por %p136, %p137
      %p139 = scmp.ne.s32.totalorder %s125, %s126
      %p140 = scmp.eq.s32.totalorder %s33, 1
      %p141 = por %p139, %p140
      %p143 = scmp.ne.s32.totalorder %s126, %s142
      %p144 = scmp.eq.s32.totalorder %s33, 0
      %p145 = por %p143, %p144
      %s146 = ssub.s32 %s35, %s42
      %p147 = scmp.eq.s32.totalorder %s146, 0
      %s149 = sadd.s32 %s148, 1
      %s150 = scalar_select %p147, %s148, %s149
      %p153 = pneg %p147
      %p154 = scmp.eq.s32.totalorder %s27, 1
      %p155 = por %p153, %p154
      %p156 = scmp.ne.s32.totalorder %s148, %s151
      %p157 = scmp.eq.s32.totalorder %s27, 0
      %p158 = por %p156, %p157
      %p159 = scmp.ne.s32.totalorder %s148, %s151
      %p160 = scmp.eq.s32.totalorder %s32, 1
      %p161 = por %p159, %p160
      %p162 = scmp.ne.s32.totalorder %s151, %s152
      %p163 = scmp.eq.s32.totalorder %s32, 0
      %p164 = por %p162, %p163
      %p165 = scmp.ne.s32.totalorder %s151, %s152
      %p166 = scmp.eq.s32.totalorder %s33, 1
      %p167 = por %p165, %p166
      %p169 = scmp.ne.s32.totalorder %s152, %s168
      %p170 = scmp.eq.s32.totalorder %s33, 0
      %p171 = por %p169, %p170
      %s172 = ssub.s32 %s35, %s42
      %p173 = scmp.eq.s32.totalorder %s172, 0
      %s175 = sadd.s32 %s174, 1
      %s176 = scalar_select %p173, %s174, %s175
      %p179 = pneg %p173
      %p180 = scmp.eq.s32.totalorder %s27, 1
      %p181 = por %p179, %p180
      %p182 = scmp.ne.s32.totalorder %s174, %s177
      %p183 = scmp.eq.s32.totalorder %s27, 0
      %p184 = por %p182, %p183
      %p185 = scmp.ne.s32.totalorder %s174, %s177
      %p186 = scmp.eq.s32.totalorder %s32, 1
      %p187 = por %p185, %p186
      %p188 = scmp.ne.s32.totalorder %s177, %s178
      %p189 = scmp.eq.s32.totalorder %s32, 0
      %p190 = por %p188, %p189
      %p191 = scmp.ne.s32.totalorder %s177, %s178
      %p192 = scmp.eq.s32.totalorder %s33, 1
      %p193 = por %p191, %p192
      %p195 = scmp.ne.s32.totalorder %s178, %s194
      %p196 = scmp.eq.s32.totalorder %s33, 0
      %p197 = por %p195, %p196
      %s198 = ssub.s32 %s35, %s42
      %p199 = scmp.eq.s32.totalorder %s198, 0
      %s201 = sadd.s32 %s200, 1
      %s202 = scalar_select %p199, %s200, %s201
      %p205 = pneg %p199
      %p206 = scmp.eq.s32.totalorder %s27, 1
      %p207 = por %p205, %p206
      %p208 = scmp.ne.s32.totalorder %s200, %s203
      %p209 = scmp.eq.s32.totalorder %s27, 0
      %p210 = por %p208, %p209
      %p211 = scmp.ne.s32.totalorder %s200, %s203
      %p212 = scmp.eq.s32.totalorder %s32, 1
      %p213 = por %p211, %p212
      %p214 = scmp.ne.s32.totalorder %s203, %s204
      %p215 = scmp.eq.s32.totalorder %s32, 0
      %p216 = por %p214, %p215
      %p217 = scmp.ne.s32.totalorder %s203, %s204
      %p218 = scmp.eq.s32.totalorder %s33, 1
      %p219 = por %p217, %p218
      %p221 = scmp.ne.s32.totalorder %s204, %s220
      %p222 = scmp.eq.s32.totalorder %s33, 0
      %p223 = por %p221, %p222
      %s224 = ssub.s32 %s35, %s42
      %p225 = scmp.eq.s32.totalorder %s224, 0
      %s227 = sadd.s32 %s226, 1
      %s228 = scalar_select %p225, %s226, %s227
      %p231 = pneg %p225
      %p232 = scmp.eq.s32.totalorder %s27, 1
      %p233 = por %p231, %p232
      %p234 = scmp.ne.s32.totalorder %s226, %s229
      %p235 = scmp.eq.s32.totalorder %s27, 0
      %p236 = por %p234, %p235
      %p237 = scmp.ne.s32.totalorder %s226, %s229
      %p238 = scmp.eq.s32.totalorder %s32, 1
      %p239 = por %p237, %p238
      %p240 = scmp.ne.s32.totalorder %s229, %s230
      %p241 = scmp.eq.s32.totalorder %s32, 0
      %p242 = por %p240, %p241
      %p243 = scmp.ne.s32.totalorder %s229, %s230
      %p244 = scmp.eq.s32.totalorder %s33, 1
      %p245 = por %p243, %p244
      %p247 = scmp.ne.s32.totalorder %s230, %s246
      %p248 = scmp.eq.s32.totalorder %s33, 0
      %p249 = por %p247, %p248
      %s250 = ssub.s32 %s35, %s42
      %p251 = scmp.eq.s32.totalorder %s250, 0
      %s253 = sadd.s32 %s252, 1
      %s254 = scalar_select %p251, %s252, %s253
      %p257 = pneg %p251
      %p258 = scmp.eq.s32.totalorder %s27, 1
      %p259 = por %p257, %p258
      %p260 = scmp.ne.s32.totalorder %s252, %s255
      %p261 = scmp.eq.s32.totalorder %s27, 0
      %p262 = por %p260, %p261
      %p263 = scmp.ne.s32.totalorder %s252, %s255
      %p264 = scmp.eq.s32.totalorder %s32, 1
      %p265 = por %p263, %p264
      %p266 = scmp.ne.s32.totalorder %s255, %s256
      %p267 = scmp.eq.s32.totalorder %s32, 0
      %p268 = por %p266, %p267
      %p269 = scmp.ne.s32.totalorder %s255, %s256
      %p270 = scmp.eq.s32.totalorder %s33, 1
      %p271 = por %p269, %p270
      %p273 = scmp.ne.s32.totalorder %s256, %s272
      %p274 = scmp.eq.s32.totalorder %s33, 0
      %p275 = por %p273, %p274
      %s276 = ssub.s32 %s35, %s42
      %p277 = scmp.eq.s32.totalorder %s276, 0
      %s279 = sadd.s32 %s278, 1
      %s280 = scalar_select %p277, %s278, %s279
      %p283 = pneg %p277
      %p284 = scmp.eq.s32.totalorder %s27, 1
      %p285 = por %p283, %p284
      %p286 = scmp.ne.s32.totalorder %s278, %s281
      %p287 = scmp.eq.s32.totalorder %s27, 0
      %p288 = por %p286, %p287
      %p289 = scmp.ne.s32.totalorder %s278, %s281
      %p290 = scmp.eq.s32.totalorder %s32, 1
      %p291 = por %p289, %p290
      %p292 = scmp.ne.s32.totalorder %s281, %s282
      %p293 = scmp.eq.s32.totalorder %s32, 0
      %p294 = por %p292, %p293
      %p295 = scmp.ne.s32.totalorder %s281, %s282
      %p296 = scmp.eq.s32.totalorder %s33, 1
      %p297 = por %p295, %p296
      %p299 = scmp.ne.s32.totalorder %s282, %s298
      %p300 = scmp.eq.s32.totalorder %s33, 0
      %p301 = por %p299, %p300
      %s303 = sadd.s32 %s302, 1
      %p306 = scmp.eq.s32.totalorder %s27, 1
      %p307 = scmp.ne.s32.totalorder %s302, %s304
      %p308 = scmp.eq.s32.totalorder %s27, 0
      %p309 = por %p307, %p308
      %p310 = scmp.ne.s32.totalorder %s302, %s304
      %p311 = scmp.eq.s32.totalorder %s32, 1
      %p312 = por %p310, %p311
      %p313 = scmp.ne.s32.totalorder %s304, %s305
      %p314 = scmp.eq.s32.totalorder %s32, 0
      %p315 = por %p313, %p314
      %p316 = scmp.ne.s32.totalorder %s304, %s305
      %p317 = scmp.eq.s32.totalorder %s33, 1
      %p318 = por %p316, %p317
      %p320 = scmp.ne.s32.totalorder %s305, %s319
      %p321 = scmp.eq.s32.totalorder %s33, 0
      %p322 = por %p320, %p321
      %s324 = sadd.s32 %s323, 1
      %p327 = scmp.eq.s32.totalorder %s27, 1
      %p328 = scmp.ne.s32.totalorder %s323, %s325
      %p329 = scmp.eq.s32.totalorder %s27, 0
      %p330 = por %p328, %p329
      %p331 = scmp.ne.s32.totalorder %s323, %s325
      %p332 = scmp.eq.s32.totalorder %s32, 1
      %p333 = por %p331, %p332
      %p334 = scmp.ne.s32.totalorder %s325, %s326
      %p335 = scmp.eq.s32.totalorder %s32, 0
      %p336 = por %p334, %p335
      %p337 = scmp.ne.s32.totalorder %s325, %s326
      %p338 = scmp.eq.s32.totalorder %s33, 1
      %p339 = por %p337, %p338
      %p341 = scmp.ne.s32.totalorder %s326, %s340
      %p342 = scmp.eq.s32.totalorder %s33, 0
      %p343 = por %p341, %p342
      %s345 = sadd.s32 %s344, 1
      %p348 = scmp.eq.s32.totalorder %s27, 1
      %p349 = scmp.ne.s32.totalorder %s344, %s346
      %p350 = scmp.eq.s32.totalorder %s27, 0
      %p351 = por %p349, %p350
      %p352 = scmp.ne.s32.totalorder %s344, %s346
      %p353 = scmp.eq.s32.totalorder %s32, 1
      %p354 = por %p352, %p353
      %p355 = scmp.ne.s32.totalorder %s346, %s347
      %p356 = scmp.eq.s32.totalorder %s32, 0
      %p357 = por %p355, %p356
      %p358 = scmp.ne.s32.totalorder %s346, %s347
      %p359 = scmp.eq.s32.totalorder %s33, 1
      %p360 = por %p358, %p359
      %p362 = scmp.ne.s32.totalorder %s347, %s361
      %p363 = scmp.eq.s32.totalorder %s33, 0
      %p364 = por %p362, %p363
      %s366 = sadd.s32 %s365, 1
      %p369 = scmp.eq.s32.totalorder %s27, 1
      %p370 = scmp.ne.s32.totalorder %s365, %s367
      %p371 = scmp.eq.s32.totalorder %s27, 0
      %p372 = por %p370, %p371
      %p373 = scmp.ne.s32.totalorder %s365, %s367
      %p374 = scmp.eq.s32.totalorder %s32, 1
      %p375 = por %p373, %p374
      %p376 = scmp.ne.s32.totalorder %s367, %s368
      %p377 = scmp.eq.s32.totalorder %s32, 0
      %p378 = por %p376, %p377
      %p379 = scmp.ne.s32.totalorder %s367, %s368
      %p380 = scmp.eq.s32.totalorder %s33, 1
      %p381 = por %p379, %p380
      %p383 = scmp.ne.s32.totalorder %s368, %s382
      %p384 = scmp.eq.s32.totalorder %s33, 0
      %p385 = por %p383, %p384
      %s387 = sadd.s32 %s386, 1
      %p390 = scmp.eq.s32.totalorder %s27, 1
      %p391 = scmp.ne.s32.totalorder %s386, %s388
      %p392 = scmp.eq.s32.totalorder %s27, 0
      %p393 = por %p391, %p392
      %p394 = scmp.ne.s32.totalorder %s386, %s388
      %p395 = scmp.eq.s32.totalorder %s32, 1
      %p396 = por %p394, %p395
      %p397 = scmp.ne.s32.totalorder %s388, %s389
      %p398 = scmp.eq.s32.totalorder %s32, 0
      %p399 = por %p397, %p398
      %p400 = scmp.ne.s32.totalorder %s388, %s389
      %p401 = scmp.eq.s32.totalorder %s33, 1
      %p402 = por %p400, %p401
      %p404 = scmp.ne.s32.totalorder %s389, %s403
      %p405 = scmp.eq.s32.totalorder %s33, 0
      %p406 = por %p404, %p405
      %s408 = sadd.s32 %s407, 1
      %p411 = scmp.eq.s32.totalorder %s27, 1
      %p412 = scmp.ne.s32.totalorder %s407, %s409
      %p413 = scmp.eq.s32.totalorder %s27, 0
      %p414 = por %p412, %p413
      %p415 = scmp.ne.s32.totalorder %s407, %s409
      %p416 = scmp.eq.s32.totalorder %s32, 1
      %p417 = por %p415, %p416
      %p418 = scmp.ne.s32.totalorder %s409, %s410
      %p419 = scmp.eq.s32.totalorder %s32, 0
      %p420 = por %p418, %p419
      %p421 = scmp.ne.s32.totalorder %s409, %s410
      %p422 = scmp.eq.s32.totalorder %s33, 1
      %p423 = por %p421, %p422
      %p425 = scmp.ne.s32.totalorder %s410, %s424
      %p426 = scmp.eq.s32.totalorder %s33, 0
      %p427 = por %p425, %p426
      %s428 = ssub.s32 %s34, %s46
      %p429 = scmp.eq.s32.totalorder %s428, 0
      %s431 = sadd.s32 %s430, 1
      %s432 = scalar_select %p429, %s430, %s431
      %p435 = pneg %p429
      %p436 = scmp.eq.s32.totalorder %s27, 1
      %p437 = por %p435, %p436
      %p438 = scmp.ne.s32.totalorder %s430, %s433
      %p439 = scmp.eq.s32.totalorder %s27, 0
      %p440 = por %p438, %p439
      %p441 = scmp.ne.s32.totalorder %s430, %s433
      %p442 = scmp.eq.s32.totalorder %s32, 1
      %p443 = por %p441, %p442
      %p444 = scmp.ne.s32.totalorder %s433, %s434
      %p445 = scmp.eq.s32.totalorder %s32, 0
      %p446 = por %p444, %p445
      %p447 = scmp.ne.s32.totalorder %s433, %s434
      %p448 = scmp.eq.s32.totalorder %s33, 1
      %p449 = por %p447, %p448
      %p451 = scmp.ne.s32.totalorder %s434, %s450
      %p452 = scmp.eq.s32.totalorder %s33, 0
      %p453 = por %p451, %p452
      %p454 = scmp.le.s32.totalorder 1, %s27
      %p455 = scmp.lt.s32.totalorder %s27, 3
      %p456 = pnand %p454, %p455
      %p457 = pneg %p456
      // Predicated region
      $region9: #{tpu_custom_call.1} parent=5 // pred_check
        _
      $region10: #{tpu_custom_call.1} parent=5 // pred_check_branch
        %459 = sbr.rel (%p456) target = $region12
      $region11: #{tpu_custom_call.1} parent=5 // pred_region
        %s460 = ssub.s32 %s27, 1
        // Predicated region
        $region13: #{tpu_custom_call.1} parent=11 // pred_check
          %p461 = pneg %p65
        $region14: #{tpu_custom_call.1} parent=11 // pred_check_branch
          %463 = sbr.rel (%p461) target = $region16
        $region15: #{tpu_custom_call.1} parent=11 // pred_region
          %s464 = smul.u32 2, %s36
          %466 = vsyncadd [#allocation5], 0
          %s467 = smul.addr %s464, 8
          %s468 = scalar_lea.hbm %s0, %s467
          %s469 = sshll.u32 %s468, 4
          %s470 = int_to_ptr.hbm [resolvable:$true] %s469
          %s471 = sshll.u32 [#allocation4], 4
          %s472 = int_to_ptr.vmem [resolvable:$true] %s471
          %477 = dma.hbm_to_vmem [thread:$0]  %s470, 256, %s472, [#allocation5], 128, 128, 8
        $region16: #{tpu_custom_call.1} parent=11 // pred_fallthru
          _
        // Predicated region
        $region17: #{tpu_custom_call.1} parent=11 // pred_check
          %p478 = pneg %p86
        $region18: #{tpu_custom_call.1} parent=11 // pred_check_branch
          %480 = sbr.rel (%p478) target = $region20
        $region19: #{tpu_custom_call.1} parent=11 // pred_region
          %482 = vsyncadd [#allocation8], 0
          %s484 = sshll.u32 %s1, 4
          %s485 = int_to_ptr.hbm [resolvable:$true] %s484
          %s486 = sshll.u32 [#allocation7], 4
          %s487 = int_to_ptr.vmem [resolvable:$true] %s486
          %489 = dma.hbm_to_vmem [thread:$0]  %s485, 128, %s487, [#allocation8]
        $region20: #{tpu_custom_call.1} parent=11 // pred_fallthru
          _
        // Predicated region
        $region21: #{tpu_custom_call.1} parent=11 // pred_check
          %p490 = pneg %p315
        $region22: #{tpu_custom_call.1} parent=11 // pred_check_branch
          %492 = sbr.rel (%p490) target = $region24
        $region23: #{tpu_custom_call.1} parent=11 // pred_region
          _
        $region24: #{tpu_custom_call.1} parent=11 // pred_fallthru
          _
        // Predicated region
        $region25: #{tpu_custom_call.1} parent=11 // pred_check
          %p493 = pneg %p336
        $region26: #{tpu_custom_call.1} parent=11 // pred_check_branch
          %495 = sbr.rel (%p493) target = $region28
        $region27: #{tpu_custom_call.1} parent=11 // pred_region
          %497 = vsyncadd [#allocation8], 0
          %s499 = sshll.u32 %s11, 4
          %s500 = int_to_ptr.hbm [resolvable:$true] %s499
          %s501 = sshll.u32 [#allocation12], 4
          %s502 = int_to_ptr.vmem [resolvable:$true] %s501
          %504 = dma.hbm_to_vmem [thread:$0]  %s500, 16, %s502, [#allocation8]
        $region28: #{tpu_custom_call.1} parent=11 // pred_fallthru
          _
        // Predicated region
        $region29: #{tpu_custom_call.1} parent=11 // pred_check
          %p505 = pneg %p357
        $region30: #{tpu_custom_call.1} parent=11 // pred_check_branch
          %507 = sbr.rel (%p505) target = $region32
        $region31: #{tpu_custom_call.1} parent=11 // pred_region
          _
        $region32: #{tpu_custom_call.1} parent=11 // pred_fallthru
          _
        // Predicated region
        $region33: #{tpu_custom_call.1} parent=11 // pred_check
          %p508 = pneg %p378
        $region34: #{tpu_custom_call.1} parent=11 // pred_check_branch
          %510 = sbr.rel (%p508) target = $region36
        $region35: #{tpu_custom_call.1} parent=11 // pred_region
          _
        $region36: #{tpu_custom_call.1} parent=11 // pred_fallthru
          _
        // Predicated region
        $region37: #{tpu_custom_call.1} parent=11 // pred_check
          %p511 = pneg %p399
        $region38: #{tpu_custom_call.1} parent=11 // pred_check_branch
          %513 = sbr.rel (%p511) target = $region40
        $region39: #{tpu_custom_call.1} parent=11 // pred_region
          _
        $region40: #{tpu_custom_call.1} parent=11 // pred_fallthru
          _
        // Predicated region
        $region41: #{tpu_custom_call.1} parent=11 // pred_check
          %p514 = pneg %p420
        $region42: #{tpu_custom_call.1} parent=11 // pred_check_branch
          %516 = sbr.rel (%p514) target = $region44
        $region43: #{tpu_custom_call.1} parent=11 // pred_region
          _
        $region44: #{tpu_custom_call.1} parent=11 // pred_fallthru
          _
      $region12: #{tpu_custom_call.1} parent=5 // pred_fallthru
        _
      %p517 = scmp.lt.s32.totalorder %s27, 2
      // Predicated region
      $region45: #{tpu_custom_call.1} parent=5 // pred_check
        %p518 = pneg %p517
      $region46: #{tpu_custom_call.1} parent=5 // pred_check_branch
        %520 = sbr.rel (%p518) target = $region48
      $region47: #{tpu_custom_call.1} parent=5 // pred_region
        // Predicated region
        $region49: #{tpu_custom_call.1} parent=47 // pred_check
          %p521 = pneg %p106
        $region50: #{tpu_custom_call.1} parent=47 // pred_check_branch
          %523 = sbr.rel (%p521) target = $region52
        $region51: #{tpu_custom_call.1} parent=47 // pred_region
          %s524 = sand.u32 %s27, 1
          %s525 = scalar_lea.sflag [#allocation5], %s524
          %s526 = sand.u32 %s96, 1
          %s527 = smul.addr %s526, 8
          %s528 = scalar_lea.vmem [#allocation9], %s527
          %530 = vsyncadd %s525, 0
          %s531 = smul.addr %s35, 8
          %s532 = scalar_lea.hbm %s2, %s531
          %s534 = sshll.u32 %s532, 4
          %s535 = int_to_ptr.hbm [resolvable:$true] %s534
          %s536 = sshll.u32 %s528, 4
          %s537 = int_to_ptr.vmem [resolvable:$true] %s536
          %539 = dma.hbm_to_vmem [thread:$0]  %s535, 128, %s537, %s525
        $region52: #{tpu_custom_call.1} parent=47 // pred_fallthru
          _
        // Predicated region
        $region53: #{tpu_custom_call.1} parent=47 // pred_check
          %p540 = pneg %p132
        $region54: #{tpu_custom_call.1} parent=47 // pred_check_branch
          %542 = sbr.rel (%p540) target = $region56
        $region55: #{tpu_custom_call.1} parent=47 // pred_region
          %p543 = scmp.lt.s32.totalorder %s35, 1
          %s544 = scalar_select %p543, %s35, 1
          %s545 = smul.addr %s544, 4
          %s546 = smul.addr %s545, 4
          %s547 = scalar_lea.vmem %s3, %s546
        $region56: #{tpu_custom_call.1} parent=47 // pred_fallthru
          _
        // Predicated region
        $region57: #{tpu_custom_call.1} parent=47 // pred_check
          %p548 = pneg %p158
        $region58: #{tpu_custom_call.1} parent=47 // pred_check_branch
          %550 = sbr.rel (%p548) target = $region60
        $region59: #{tpu_custom_call.1} parent=47 // pred_region
          %p551 = scmp.lt.s32.totalorder %s35, 1
          %s552 = scalar_select %p551, %s35, 1
          %s553 = smul.addr %s552, 4
          %s554 = smul.addr %s553, 4
          %s555 = scalar_lea.vmem %s4, %s554
        $region60: #{tpu_custom_call.1} parent=47 // pred_fallthru
          _
        // Predicated region
        $region61: #{tpu_custom_call.1} parent=47 // pred_check
          %p556 = pneg %p184
        $region62: #{tpu_custom_call.1} parent=47 // pred_check_branch
          %558 = sbr.rel (%p556) target = $region64
        $region63: #{tpu_custom_call.1} parent=47 // pred_region
          %p559 = scmp.lt.s32.totalorder %s35, 1
          %s560 = scalar_select %p559, %s35, 1
          %s561 = smul.addr %s560, 4
          %s562 = smul.addr %s561, 4
          %s563 = scalar_lea.vmem %s5, %s562
        $region64: #{tpu_custom_call.1} parent=47 // pred_fallthru
          _
        // Predicated region
        $region65: #{tpu_custom_call.1} parent=47 // pred_check
          %p564 = pneg %p210
        $region66: #{tpu_custom_call.1} parent=47 // pred_check_branch
          %566 = sbr.rel (%p564) target = $region68
        $region67: #{tpu_custom_call.1} parent=47 // pred_region
          %s567 = sand.u32 %s27, 1
          %s568 = scalar_lea.sflag [#allocation5], %s567
          %s569 = sand.u32 %s200, 1
          %s570 = smul.addr %s569, 16
          %s571 = scalar_lea.vmem [#allocation10], %s570
          %573 = vsyncadd %s568, 0
          %s574 = smul.addr %s35, 4
          %s575 = smul.addr %s574, 4
          %s576 = scalar_lea.hbm %s6, %s575
          %s577 = sshll.u32 %s576, 4
          %s578 = int_to_ptr.hbm [resolvable:$true] %s577
          %s579 = sshll.u32 %s571, 4
          %s580 = int_to_ptr.vmem [resolvable:$true] %s579
          %585 = dma.hbm_to_vmem [thread:$0]  %s578, 256, %s580, %s568, 64, 64, 4
        $region68: #{tpu_custom_call.1} parent=47 // pred_fallthru
          _
        // Predicated region
        $region69: #{tpu_custom_call.1} parent=47 // pred_check
          %p586 = pneg %p236
        $region70: #{tpu_custom_call.1} parent=47 // pred_check_branch
          %588 = sbr.rel (%p586) target = $region72
        $region71: #{tpu_custom_call.1} parent=47 // pred_region
          %s589 = sand.u32 %s27, 1
          %s590 = scalar_lea.sflag [#allocation5], %s589
          %s591 = sand.u32 %s226, 1
          %s592 = smul.addr %s591, 16
          %s593 = scalar_lea.vmem [#allocation11], %s592
          %595 = vsyncadd %s590, 0
          %s596 = smul.addr %s35, 4
          %s597 = smul.addr %s596, 4
          %s598 = scalar_lea.hbm %s7, %s597
          %s599 = sshll.u32 %s598, 4
          %s600 = int_to_ptr.hbm [resolvable:$true] %s599
          %s601 = sshll.u32 %s593, 4
          %s602 = int_to_ptr.vmem [resolvable:$true] %s601
          %607 = dma.hbm_to_vmem [thread:$0]  %s600, 256, %s602, %s590, 64, 64, 4
        $region72: #{tpu_custom_call.1} parent=47 // pred_fallthru
          _
        // Predicated region
        $region73: #{tpu_custom_call.1} parent=47 // pred_check
          %p608 = pneg %p262
        $region74: #{tpu_custom_call.1} parent=47 // pred_check_branch
          %610 = sbr.rel (%p608) target = $region76
        $region75: #{tpu_custom_call.1} parent=47 // pred_region
          %p611 = scmp.lt.s32.totalorder %s35, 1
          %s612 = scalar_select %p611, %s35, 1
          %s613 = scalar_lea.vmem %s8, %s612
        $region76: #{tpu_custom_call.1} parent=47 // pred_fallthru
          _
        // Predicated region
        $region77: #{tpu_custom_call.1} parent=47 // pred_check
          %p614 = pneg %p288
        $region78: #{tpu_custom_call.1} parent=47 // pred_check_branch
          %616 = sbr.rel (%p614) target = $region80
        $region79: #{tpu_custom_call.1} parent=47 // pred_region
          %p617 = scmp.lt.s32.totalorder %s35, 1
          %s618 = scalar_select %p617, %s35, 1
          %s619 = smul.addr %s618, 8
          %s620 = smul.addr %s619, 4
          %s621 = scalar_lea.vmem %s9, %s620
        $region80: #{tpu_custom_call.1} parent=47 // pred_fallthru
          _
      $region48: #{tpu_custom_call.1} parent=5 // pred_fallthru
        _
      %p622 = scmp.le.s32.totalorder 1, %s27
      %p623 = scmp.lt.s32.totalorder %s27, 3
      %p624 = pnand %p622, %p623
      %p625 = pneg %p624
      // Predicated region
      $region81: #{tpu_custom_call.1} parent=5 // pred_check
        _
      $region82: #{tpu_custom_call.1} parent=5 // pred_check_branch
        %627 = sbr.rel (%p624) target = $region84
      $region83: #{tpu_custom_call.1} parent=5 // pred_region
        %s628 = ssub.s32 %s27, 1
        // Predicated region
        $region85: #{tpu_custom_call.1} parent=83 // pred_check
          %p629 = pneg %p65
        $region86: #{tpu_custom_call.1} parent=83 // pred_check_branch
          %631 = sbr.rel (%p629) target = $region88
        $region87: #{tpu_custom_call.1} parent=83 // pred_region
          %633 = dma.done [#allocation5], 256
        $region88: #{tpu_custom_call.1} parent=83 // pred_fallthru
          _
        // Predicated region
        $region89: #{tpu_custom_call.1} parent=83 // pred_check
          %p634 = pneg %p86
        $region90: #{tpu_custom_call.1} parent=83 // pred_check_branch
          %636 = sbr.rel (%p634) target = $region92
        $region91: #{tpu_custom_call.1} parent=83 // pred_region
          %638 = dma.done [#allocation8], 128
        $region92: #{tpu_custom_call.1} parent=83 // pred_fallthru
          _
        %s639 = sand.u32 %s32, 1
        %s640 = scalar_lea.sflag [#allocation5], %s639
        %s641 = sand.u32 %s99, 1
        %s642 = smul.addr %s641, 8
        %s643 = scalar_lea.vmem [#allocation9], %s642
        // Predicated region
        $region93: #{tpu_custom_call.1} parent=83 // pred_check
          %p644 = pneg %p112
        $region94: #{tpu_custom_call.1} parent=83 // pred_check_branch
          %646 = sbr.rel (%p644) target = $region96
        $region95: #{tpu_custom_call.1} parent=83 // pred_region
          %648 = dma.done %s640, 128
        $region96: #{tpu_custom_call.1} parent=83 // pred_fallthru
          _
        %s649 = sand.u32 %s32, 1
        %s650 = scalar_lea.sflag [#allocation5], %s649
        %s651 = sand.u32 %s203, 1
        %s652 = smul.addr %s651, 16
        %s653 = scalar_lea.vmem [#allocation10], %s652
        // Predicated region
        $region97: #{tpu_custom_call.1} parent=83 // pred_check
          %p654 = pneg %p216
        $region98: #{tpu_custom_call.1} parent=83 // pred_check_branch
          %656 = sbr.rel (%p654) target = $region100
        $region99: #{tpu_custom_call.1} parent=83 // pred_region
          %658 = dma.done %s650, 256
        $region100: #{tpu_custom_call.1} parent=83 // pred_fallthru
          _
        %s659 = sand.u32 %s32, 1
        %s660 = scalar_lea.sflag [#allocation5], %s659
        %s661 = sand.u32 %s229, 1
        %s662 = smul.addr %s661, 16
        %s663 = scalar_lea.vmem [#allocation11], %s662
        // Predicated region
        $region101: #{tpu_custom_call.1} parent=83 // pred_check
          %p664 = pneg %p242
        $region102: #{tpu_custom_call.1} parent=83 // pred_check_branch
          %666 = sbr.rel (%p664) target = $region104
        $region103: #{tpu_custom_call.1} parent=83 // pred_region
          %668 = dma.done %s660, 256
        $region104: #{tpu_custom_call.1} parent=83 // pred_fallthru
          _
        // Predicated region
        $region105: #{tpu_custom_call.1} parent=83 // pred_check
          %p669 = pneg %p336
        $region106: #{tpu_custom_call.1} parent=83 // pred_check_branch
          %671 = sbr.rel (%p669) target = $region108
        $region107: #{tpu_custom_call.1} parent=83 // pred_region
          %673 = dma.done [#allocation8], 16
        $region108: #{tpu_custom_call.1} parent=83 // pred_fallthru
          _
        %p674 = pneg %p65
        %p675 = pneg %p62
        %p676 = pneg %p86
        %p677 = pneg %p83
        %s678 = sand.u32 %s32, 1
        %s679 = scalar_lea.sflag [#allocation5], %s678
        %s680 = sand.u32 %s99, 1
        %s681 = smul.addr %s680, 8
        %s682 = scalar_lea.vmem [#allocation9], %s681
        %p683 = pneg %p112
        %p684 = pneg %p109
        %p685 = scmp.lt.s32.totalorder %s37, 1
        %s686 = scalar_select %p685, %s37, 1
        %s687 = smul.addr %s686, 4
        %s688 = smul.addr %s687, 4
        %s689 = scalar_lea.vmem %s3, %s688
        %p690 = pneg %p138
        %p691 = pneg %p135
        %p692 = scmp.lt.s32.totalorder %s37, 1
        %s693 = scalar_select %p692, %s37, 1
        %s694 = smul.addr %s693, 4
        %s695 = smul.addr %s694, 4
        %s696 = scalar_lea.vmem %s4, %s695
        %p697 = pneg %p164
        %p698 = pneg %p161
        %p699 = scmp.lt.s32.totalorder %s37, 1
        %s700 = scalar_select %p699, %s37, 1
        %s701 = smul.addr %s700, 4
        %s702 = smul.addr %s701, 4
        %s703 = scalar_lea.vmem %s5, %s702
        %p704 = pneg %p190
        %p705 = pneg %p187
        %s706 = sand.u32 %s32, 1
        %s707 = scalar_lea.sflag [#allocation5], %s706
        %s708 = sand.u32 %s203, 1
        %s709 = smul.addr %s708, 16
        %s710 = scalar_lea.vmem [#allocation10], %s709
        %p711 = pneg %p216
        %p712 = pneg %p213
        %s713 = sand.u32 %s32, 1
        %s714 = scalar_lea.sflag [#allocation5], %s713
        %s715 = sand.u32 %s229, 1
        %s716 = smul.addr %s715, 16
        %s717 = scalar_lea.vmem [#allocation11], %s716
        %p718 = pneg %p242
        %p719 = pneg %p239
        %p720 = scmp.lt.s32.totalorder %s37, 1
        %s721 = scalar_select %p720, %s37, 1
        %s722 = scalar_lea.vmem %s8, %s721
        %p723 = pneg %p268
        %p724 = pneg %p265
        %p725 = scmp.lt.s32.totalorder %s37, 1
        %s726 = scalar_select %p725, %s37, 1
        %s727 = smul.addr %s726, 8
        %s728 = smul.addr %s727, 4
        %s729 = scalar_lea.vmem %s9, %s728
        %p730 = pneg %p294
        %p731 = pneg %p291
        %p732 = pneg %p315
        %p733 = pneg %p312
        %p734 = pneg %p336
        %p735 = pneg %p333
        %p736 = pneg %p357
        %p737 = pneg %p354
        %p738 = pneg %p378
        %p739 = pneg %p375
        %p740 = pneg %p399
        %p741 = pneg %p396
        %p742 = pneg %p420
        %p743 = pneg %p417
        %p744 = pneg %p446
        %p745 = pneg %p443
        %s746 = smul.u32 2, %s36
        %p747 = scmp.lt.s32.totalorder %s37, 1
        %s748 = scalar_select %p747, %s37, 1
        %s749 = smul.addr %s748, 4
        %s750 = smul.addr %s749, 4
        %s751 = scalar_lea.vmem %s3, %s750
        %p752 = scmp.lt.s32.totalorder %s37, 1
        %s753 = scalar_select %p752, %s37, 1
        %s754 = smul.addr %s753, 4
        %s755 = smul.addr %s754, 4
        %s756 = scalar_lea.vmem %s4, %s755
        %p757 = scmp.lt.s32.totalorder %s37, 1
        %s758 = scalar_select %p757, %s37, 1
        %s759 = smul.addr %s758, 4
        %s760 = smul.addr %s759, 4
        %s761 = scalar_lea.vmem %s5, %s760
        %p762 = scmp.lt.s32.totalorder %s37, 1
        %s763 = scalar_select %p762, %s37, 1
        %s764 = scalar_lea.vmem %s8, %s763
        %p765 = scmp.lt.s32.totalorder %s37, 1
        %s766 = scalar_select %p765, %s37, 1
        %s767 = smul.addr %s766, 8
        %s768 = smul.addr %s767, 4
        %s769 = scalar_lea.vmem %s9, %s768
        %s770 = smul.u32 2, %s36
        %p772 = scmp.eq.s32.totalorder %s37, 0
        // Predicated region
        $region109: #{tpu_custom_call.1} parent=83 // pred_check
          %p773 = pneg %p772
        $region110: #{tpu_custom_call.1} parent=83 // pred_check_branch
          %775 = sbr.rel (%p773) target = $region112
        $region111: #{tpu_custom_call.1} parent=83 // pred_region
          %v776 = vld [vmem:[#allocation4] sm:$0xff]
          %v777 = vld [vmem:[#allocation4 + $0x8] sm:$0xff]
          %v778 = vld [vmem:[#allocation7] sm:$0xff]
          %v779 = vadd.f32 %v776, %v778
          %v780 = vadd.f32 %v777, %v778
          %vm781 = vcmask 261120
          %782 = vst.msk [vmem:[#allocation2] sm:$0xff] %vm781, %v779
          %783 = vst.msk [vmem:[#allocation2 + $0x8] sm:$0xff] %vm781, %v780
        $region112: #{tpu_custom_call.1} parent=83 // pred_fallthru
          _
        %v784 = vld [vmem:[#allocation2] sm:$0xff]
        %v785 = vld [vmem:[#allocation2 + $0x8] sm:$0xff]
        %v786 = vld [vmem:[%s643] sm:$0xff]
        %vm787 = vcmask 261120
        %v788 = vsel %vm787, %v784, 0.0
        %789 = vadd.xlane.f32.xlu0 %v788
        %v790 = vpop.xlane.xlu0 %789
        %v791 = vsel %vm787, %v785, 0.0
        %792 = vadd.xlane.f32.xlu0 %v791
        %v793 = vpop.xlane.xlu0 %792
        %v794 = vrcp.pop 32.0
        %v795 = vmul.f32 32.0, %v794
        %v796 = vsub.f32 1.0, %v795
        %v797 = vmul.f32 %v794, %v796
        %v798 = vadd.f32 %v794, %v797
        %vm799 = vweird.f32 %v794
        %v800 = vsel %vm799, %v794, %v798
        %v801 = vmul.f32 %v790, %v800
        %v802 = vmul.f32 %v793, %v800
        %v803 = vsub.f32 %v784, %v801
        %v804 = vsub.f32 %v785, %v802
        %v805 = vmul.f32 %v803, %v803
        %v806 = vmul.f32 %v804, %v804
        %v807 = vsel %vm787, %v805, 0.0
        %808 = vadd.xlane.f32.xlu0 %v807
        %v809 = vpop.xlane.xlu0 %808
        %v810 = vsel %vm787, %v806, 0.0
        %811 = vadd.xlane.f32.xlu0 %v810
        %v812 = vpop.xlane.xlu0 %811
        %v813 = vmul.f32 %v809, %v800
        %v814 = vmul.f32 %v812, %v800
        %v815 = vadd.f32 %v813, 1e-05
        %v816 = vadd.f32 %v814, 1e-05
        %v817 = vrsqrt.pop %v815
        %v818 = vmul.f32 %v817, %v815
        %v819 = vmul.f32 %v818, %v817
        %v820 = vmul.f32 0.5, %v819
        %v821 = vsub.f32 1.5, %v820
        %v822 = vmul.f32 %v817, %v821
        %vm823 = vweird.f32 %v815
        %vm824 = vweird.f32 %v817
        %vm825 = vmor %vm823, %vm824
        %v826 = vsel %vm825, %v817, %v822
        %v827 = vrsqrt.pop %v816
        %v828 = vmul.f32 %v827, %v816
        %v829 = vmul.f32 %v828, %v827
        %v830 = vmul.f32 0.5, %v829
        %v831 = vsub.f32 1.5, %v830
        %v832 = vmul.f32 %v827, %v831
        %vm833 = vweird.f32 %v816
        %vm834 = vweird.f32 %v827
        %vm835 = vmor %vm833, %vm834
        %v836 = vsel %vm835, %v827, %v832
        %v837 = vmul.f32 %v803, %v826
        %v838 = vmul.f32 %v804, %v836
        %v839 = vperm.slane %v786, 0
        %v840 = vmul.f32 %v837, %v839
        %v841 = vmul.f32 %v838, %v839
        %v842 = vperm.slane %v786, 1
        %v843 = vadd.f32 %v840, %v842
        %v844 = vadd.f32 %v841, %v842
        %v845 = vpack.c.bf16 %v844, %v843
        %v846 = vld [vmem:[%s751] sm:$0xf]
        %v847 = vld [vmem:[%s751 + $0x4] sm:$0xf]
        %v848 = vld [vmem:[%s751 + $0x8] sm:$0xf]
        %v849 = vld [vmem:[%s751 + $0xc] sm:$0xf]
        %v854 = vunpack.c.l.b16 %v846
        %v855 = vunpack.c.l.b16 %v847
        %v856 = vunpack.c.l.b16 %v848
        %v857 = vunpack.c.l.b16 %v849
        %v858 = vpack.c.b16 %v855, %v854
        %v859 = vpack.c.b16 %v857, %v856
        %v863 = vsel %vm787, %v845, 0
        %865 = vmatpush.bf16.msra.mxu0 0
        %866 = vmatpush.bf16.msra.mxu0 0
        %867 = vmatpush.bf16.msra.mxu0 0
        %868 = vmatpush.bf16.msra.mxu0 0
        %869 = vmatpush.bf16.msra.mxu0 0
        %870 = vmatpush.bf16.msra.mxu0 0
        %871 = vmatpush.bf16.msra.mxu0 %v859
        %872 = vmatpush.bf16.msra.mxu0 %v858
        %873 = vmatmul.bf16.gmra.mxu0 %v863
        %v874 = vpop.f32.mrf.mxu0
        %v875 = vadd.f32 0.0, %v874
        %v876 = vpop.f32.mrf.mxu0
        %v877 = vadd.f32 0.0, %v876
        %878 = vdwg.mxu0
        %v879 = vld [vmem:[%s756] sm:$0xf]
        %v880 = vld [vmem:[%s756 + $0x4] sm:$0xf]
        %v881 = vld [vmem:[%s756 + $0x8] sm:$0xf]
        %v882 = vld [vmem:[%s756 + $0xc] sm:$0xf]
        %v887 = vunpack.c.l.b16 %v879
        %v888 = vunpack.c.l.b16 %v880
        %v889 = vunpack.c.l.b16 %v881
        %v890 = vunpack.c.l.b16 %v882
        %v891 = vpack.c.b16 %v888, %v887
        %v892 = vpack.c.b16 %v890, %v889
        %895 = vmatpush.bf16.msra.mxu0 0
        %896 = vmatpush.bf16.msra.mxu0 0
        %897 = vmatpush.bf16.msra.mxu0 0
        %898 = vmatpush.bf16.msra.mxu0 0
        %899 = vmatpush.bf16.msra.mxu0 0
        %900 = vmatpush.bf16.msra.mxu0 0
        %901 = vmatpush.bf16.msra.mxu0 %v892
        %902 = vmatpush.bf16.msra.mxu0 %v891
        %903 = vmatmul.bf16.gmra.mxu0 %v863
        %v904 = vpop.f32.mrf.mxu0
        %v905 = vadd.f32 0.0, %v904
        %v906 = vpop.f32.mrf.mxu0
        %v907 = vadd.f32 0.0, %v906
        %908 = vdwg.mxu0
        %v909 = vld [vmem:[%s761] sm:$0xf]
        %v910 = vld [vmem:[%s761 + $0x4] sm:$0xf]
        %v911 = vld [vmem:[%s761 + $0x8] sm:$0xf]
        %v912 = vld [vmem:[%s761 + $0xc] sm:$0xf]
        %v917 = vunpack.c.l.b16 %v909
        %v918 = vunpack.c.l.b16 %v910
        %v919 = vunpack.c.l.b16 %v911
        %v920 = vunpack.c.l.b16 %v912
        %v921 = vpack.c.b16 %v918, %v917
        %v922 = vpack.c.b16 %v920, %v919
        %925 = vmatpush.bf16.msra.mxu0 0
        %926 = vmatpush.bf16.msra.mxu0 0
        %927 = vmatpush.bf16.msra.mxu0 0
        %928 = vmatpush.bf16.msra.mxu0 0
        %929 = vmatpush.bf16.msra.mxu0 0
        %930 = vmatpush.bf16.msra.mxu0 0
        %931 = vmatpush.bf16.msra.mxu0 %v922
        %932 = vmatpush.bf16.msra.mxu0 %v921
        %933 = vmatmul.bf16.gmra.mxu0 %v863
        %v934 = vpop.f32.mrf.mxu0
        %v935 = vadd.f32 0.0, %v934
        %v936 = vpop.f32.mrf.mxu0
        %v937 = vadd.f32 0.0, %v936
        %938 = vdwg.mxu0
        %941 = vrot.lane.b32.xlu0 %v875, 120
        %v942 = vpop.permute.xlu0 %941
        %943 = vrot.lane.b32.xlu0 %v877, 120
        %v944 = vpop.permute.xlu0 %943
        %947 = vrot.lane.b32.xlu0 %v875, 112
        %v948 = vpop.permute.xlu0 %947
        %949 = vrot.lane.b32.xlu0 %v877, 112
        %v950 = vpop.permute.xlu0 %949
        %953 = vrot.lane.b32.xlu0 %v875, 104
        %v954 = vpop.permute.xlu0 %953
        %955 = vrot.lane.b32.xlu0 %v877, 104
        %v956 = vpop.permute.xlu0 %955
        %v959 = vrot.slane %v948, 4
        %vm960 = vcmask 1047556
        %v961 = vsel %vm960, %v959, %v875
        %v962 = vrot.slane %v875, 4
        %v963 = vsel %vm960, %v948, %v962
        %v965 = vunpack.c.l.s4 1983009808
        %v966 = vunpack.c.0.s8 %v965
        %v967 = vperm.slane %v961, %v966
        %v969 = vunpack.c.l.s4 1983009808
        %v970 = vunpack.c.0.s8 %v969
        %v971 = vperm.slane %v963, %v970
        %v972 = vrot.slane %v954, 4
        %v973 = vsel %vm960, %v972, %v942
        %v974 = vrot.slane %v942, 4
        %v975 = vsel %vm960, %v954, %v974
        %v977 = vunpack.c.l.s4 1983009808
        %v978 = vunpack.c.0.s8 %v977
        %v979 = vperm.slane %v973, %v978
        %v981 = vunpack.c.l.s4 1983009808
        %v982 = vunpack.c.0.s8 %v981
        %v983 = vperm.slane %v975, %v982
        %v984 = vrot.slane %v979, 4
        %v985 = vsel %vm960, %v984, %v967
        %v986 = vrot.slane %v967, 4
        %v987 = vsel %vm960, %v979, %v986
        %v989 = vunpack.c.l.s4 1934713408
        %v990 = vunpack.c.0.s8 %v989
        %v991 = vperm.slane %v985, %v990
        %v993 = vunpack.c.l.s4 1934713408
        %v994 = vunpack.c.0.s8 %v993
        %v995 = vperm.slane %v987, %v994
        %v996 = vrot.slane %v983, 4
        %v997 = vsel %vm960, %v996, %v971
        %v998 = vrot.slane %v971, 4
        %v999 = vsel %vm960, %v983, %v998
        %v1001 = vunpack.c.l.s4 1934713408
        %v1002 = vunpack.c.0.s8 %v1001
        %v1003 = vperm.slane %v997, %v1002
        %v1005 = vunpack.c.l.s4 1934713408
        %v1006 = vunpack.c.0.s8 %v1005
        %v1007 = vperm.slane %v999, %v1006
        %v1008 = vrot.slane %v991, 4
        %v1009 = vsel %vm960, 0.0, %v1008
        %v1010 = vrot.slane %v995, 4
        %v1011 = vsel %vm960, 0.0, %v1010
        %v1012 = vrot.slane %v1003, 4
        %v1013 = vsel %vm960, 0.0, %v1012
        %v1014 = vrot.slane %v1007, 4
        %v1015 = vsel %vm960, 0.0, %v1014
        %v1016 = vrot.slane %v950, 4
        %v1017 = vsel %vm960, %v1016, %v877
        %v1018 = vrot.slane %v877, 4
        %v1019 = vsel %vm960, %v950, %v1018
        %v1021 = vunpack.c.l.s4 1983009808
        %v1022 = vunpack.c.0.s8 %v1021
        %v1023 = vperm.slane %v1017, %v1022
        %v1025 = vunpack.c.l.s4 1983009808
        %v1026 = vunpack.c.0.s8 %v1025
        %v1027 = vperm.slane %v1019, %v1026
        %v1028 = vrot.slane %v956, 4
        %v1029 = vsel %vm960, %v1028, %v944
        %v1030 = vrot.slane %v944, 4
        %v1031 = vsel %vm960, %v956, %v1030
        %v1033 = vunpack.c.l.s4 1983009808
        %v1034 = vunpack.c.0.s8 %v1033
        %v1035 = vperm.slane %v1029, %v1034
        %v1037 = vunpack.c.l.s4 1983009808
        %v1038 = vunpack.c.0.s8 %v1037
        %v1039 = vperm.slane %v1031, %v1038
        %v1040 = vrot.slane %v1035, 4
        %v1041 = vsel %vm960, %v1040, %v1023
        %v1042 = vrot.slane %v1023, 4
        %v1043 = vsel %vm960, %v1035, %v1042
        %v1045 = vunpack.c.l.s4 1934713408
        %v1046 = vunpack.c.0.s8 %v1045
        %v1047 = vperm.slane %v1041, %v1046
        %v1049 = vunpack.c.l.s4 1934713408
        %v1050 = vunpack.c.0.s8 %v1049
        %v1051 = vperm.slane %v1043, %v1050
        %v1052 = vrot.slane %v1039, 4
        %v1053 = vsel %vm960, %v1052, %v1027
        %v1054 = vrot.slane %v1027, 4
        %v1055 = vsel %vm960, %v1039, %v1054
        %v1057 = vunpack.c.l.s4 1934713408
        %v1058 = vunpack.c.0.s8 %v1057
        %v1059 = vperm.slane %v1053, %v1058
        %v1061 = vunpack.c.l.s4 1934713408
        %v1062 = vunpack.c.0.s8 %v1061
        %v1063 = vperm.slane %v1055, %v1062
        %v1064 = vrot.slane %v1047, 4
        %v1065 = vsel %vm960, 0.0, %v1064
        %v1066 = vrot.slane %v1051, 4
        %v1067 = vsel %vm960, 0.0, %v1066
        %v1068 = vrot.slane %v1059, 4
        %v1069 = vsel %vm960, 0.0, %v1068
        %v1070 = vrot.slane %v1063, 4
        %v1071 = vsel %vm960, 0.0, %v1070
        %v1072 = vsel %vm960, %v1010, %v991
        %v1074 = vunpack.c.l.s4 1983009808
        %v1075 = vunpack.c.0.s8 %v1074
        %v1076 = vperm.slane %v1072, %v1075
        %v1077 = vrot.slane %v1011, 4
        %v1078 = vsel %vm960, %v1077, %v1009
        %v1080 = vunpack.c.l.s4 1983009808
        %v1081 = vunpack.c.0.s8 %v1080
        %v1082 = vperm.slane %v1078, %v1081
        %v1083 = vsel %vm960, %v1014, %v1003
        %v1085 = vunpack.c.l.s4 1983009808
        %v1086 = vunpack.c.0.s8 %v1085
        %v1087 = vperm.slane %v1083, %v1086
        %v1088 = vrot.slane %v1015, 4
        %v1089 = vsel %vm960, %v1088, %v1013
        %v1091 = vunpack.c.l.s4 1983009808
        %v1092 = vunpack.c.0.s8 %v1091
        %v1093 = vperm.slane %v1089, %v1092
        %v1094 = vrot.slane %v1082, 4
        %v1095 = vsel %vm960, %v1094, %v1076
        %v1096 = vrot.slane %v1076, 4
        %v1097 = vsel %vm960, %v1082, %v1096
        %v1099 = vunpack.c.l.s4 1934713408
        %v1100 = vunpack.c.0.s8 %v1099
        %v1101 = vperm.slane %v1095, %v1100
        %v1103 = vunpack.c.l.s4 1934713408
        %v1104 = vunpack.c.0.s8 %v1103
        %v1105 = vperm.slane %v1097, %v1104
        %v1106 = vrot.slane %v1093, 4
        %v1107 = vsel %vm960, %v1106, %v1087
        %v1108 = vrot.slane %v1087, 4
        %v1109 = vsel %vm960, %v1093, %v1108
        %v1111 = vunpack.c.l.s4 1934713408
        %v1112 = vunpack.c.0.s8 %v1111
        %v1113 = vperm.slane %v1107, %v1112
        %v1115 = vunpack.c.l.s4 1934713408
        %v1116 = vunpack.c.0.s8 %v1115
        %v1117 = vperm.slane %v1109, %v1116
        %v1118 = vrot.slane %v1113, 4
        %v1119 = vsel %vm960, %v1118, %v1101
        %v1120 = vrot.slane %v1101, 4
        %v1121 = vsel %vm960, %v1113, %v1120
        %v1122 = vrot.slane %v1117, 4
        %v1123 = vsel %vm960, %v1122, %v1105
        %v1124 = vrot.slane %v1105, 4
        %v1125 = vsel %vm960, %v1117, %v1124
        %v1126 = vsel %vm960, %v1066, %v1047
        %v1128 = vunpack.c.l.s4 1983009808
        %v1129 = vunpack.c.0.s8 %v1128
        %v1130 = vperm.slane %v1126, %v1129
        %v1131 = vrot.slane %v1067, 4
        %v1132 = vsel %vm960, %v1131, %v1065
        %v1134 = vunpack.c.l.s4 1983009808
        %v1135 = vunpack.c.0.s8 %v1134
        %v1136 = vperm.slane %v1132, %v1135
        %v1137 = vsel %vm960, %v1070, %v1059
        %v1139 = vunpack.c.l.s4 1983009808
        %v1140 = vunpack.c.0.s8 %v1139
        %v1141 = vperm.slane %v1137, %v1140
        %v1142 = vrot.slane %v1071, 4
        %v1143 = vsel %vm960, %v1142, %v1069
        %v1145 = vunpack.c.l.s4 1983009808
        %v1146 = vunpack.c.0.s8 %v1145
        %v1147 = vperm.slane %v1143, %v1146
        %v1148 = vrot.slane %v1136, 4
        %v1149 = vsel %vm960, %v1148, %v1130
        %v1150 = vrot.slane %v1130, 4
        %v1151 = vsel %vm960, %v1136, %v1150
        %v1153 = vunpack.c.l.s4 1934713408
        %v1154 = vunpack.c.0.s8 %v1153
        %v1155 = vperm.slane %v1149, %v1154
        %v1157 = vunpack.c.l.s4 1934713408
        %v1158 = vunpack.c.0.s8 %v1157
        %v1159 = vperm.slane %v1151, %v1158
        %v1160 = vrot.slane %v1147, 4
        %v1161 = vsel %vm960, %v1160, %v1141
        %v1162 = vrot.slane %v1141, 4
        %v1163 = vsel %vm960, %v1147, %v1162
        %v1165 = vunpack.c.l.s4 1934713408
        %v1166 = vunpack.c.0.s8 %v1165
        %v1167 = vperm.slane %v1161, %v1166
        %v1169 = vunpack.c.l.s4 1934713408
        %v1170 = vunpack.c.0.s8 %v1169
        %v1171 = vperm.slane %v1163, %v1170
        %v1172 = vrot.slane %v1167, 4
        %v1173 = vsel %vm960, %v1172, %v1155
        %v1174 = vrot.slane %v1155, 4
        %v1175 = vsel %vm960, %v1167, %v1174
        %v1176 = vrot.slane %v1171, 4
        %v1177 = vsel %vm960, %v1176, %v1159
        %v1178 = vrot.slane %v1159, 4
        %v1179 = vsel %vm960, %v1171, %v1178
        %v1180 = vpack.c.bf16 %v1119, %v1119
        %v1181 = vpack.c.bf16 %v1173, %v1173
        %v1182 = vpack.c.bf16 %v1121, %v1121
        %v1183 = vpack.c.bf16 %v1175, %v1175
        %v1184 = vpack.c.bf16 %v1123, %v1123
        %v1185 = vpack.c.bf16 %v1177, %v1177
        %v1186 = vpack.c.bf16 %v1125, %v1125
        %v1187 = vpack.c.bf16 %v1179, %v1179
        %1190 = vrot.lane.b32.xlu0 %v905, 120
        %v1191 = vpop.permute.xlu0 %1190
        %1192 = vrot.lane.b32.xlu0 %v907, 120
        %v1193 = vpop.permute.xlu0 %1192
        %1196 = vrot.lane.b32.xlu0 %v905, 112
        %v1197 = vpop.permute.xlu0 %1196
        %1198 = vrot.lane.b32.xlu0 %v907, 112
        %v1199 = vpop.permute.xlu0 %1198
        %1202 = vrot.lane.b32.xlu0 %v905, 104
        %v1203 = vpop.permute.xlu0 %1202
        %1204 = vrot.lane.b32.xlu0 %v907, 104
        %v1205 = vpop.permute.xlu0 %1204
        %v1208 = vrot.slane %v1197, 4
        %v1209 = vsel %vm960, %v1208, %v905
        %v1210 = vrot.slane %v905, 4
        %v1211 = vsel %vm960, %v1197, %v1210
        %v1213 = vunpack.c.l.s4 1983009808
        %v1214 = vunpack.c.0.s8 %v1213
        %v1215 = vperm.slane %v1209, %v1214
        %v1217 = vunpack.c.l.s4 1983009808
        %v1218 = vunpack.c.0.s8 %v1217
        %v1219 = vperm.slane %v1211, %v1218
        %v1220 = vrot.slane %v1203, 4
        %v1221 = vsel %vm960, %v1220, %v1191
        %v1222 = vrot.slane %v1191, 4
        %v1223 = vsel %vm960, %v1203, %v1222
        %v1225 = vunpack.c.l.s4 1983009808
        %v1226 = vunpack.c.0.s8 %v1225
        %v1227 = vperm.slane %v1221, %v1226
        %v1229 = vunpack.c.l.s4 1983009808
        %v1230 = vunpack.c.0.s8 %v1229
        %v1231 = vperm.slane %v1223, %v1230
        %v1232 = vrot.slane %v1227, 4
        %v1233 = vsel %vm960, %v1232, %v1215
        %v1234 = vrot.slane %v1215, 4
        %v1235 = vsel %vm960, %v1227, %v1234
        %v1237 = vunpack.c.l.s4 1934713408
        %v1238 = vunpack.c.0.s8 %v1237
        %v1239 = vperm.slane %v1233, %v1238
        %v1241 = vunpack.c.l.s4 1934713408
        %v1242 = vunpack.c.0.s8 %v1241
        %v1243 = vperm.slane %v1235, %v1242
        %v1244 = vrot.slane %v1231, 4
        %v1245 = vsel %vm960, %v1244, %v1219
        %v1246 = vrot.slane %v1219, 4
        %v1247 = vsel %vm960, %v1231, %v1246
        %v1249 = vunpack.c.l.s4 1934713408
        %v1250 = vunpack.c.0.s8 %v1249
        %v1251 = vperm.slane %v1245, %v1250
        %v1253 = vunpack.c.l.s4 1934713408
        %v1254 = vunpack.c.0.s8 %v1253
        %v1255 = vperm.slane %v1247, %v1254
        %v1256 = vrot.slane %v1239, 4
        %v1257 = vsel %vm960, 0.0, %v1256
        %v1258 = vrot.slane %v1243, 4
        %v1259 = vsel %vm960, 0.0, %v1258
        %v1260 = vrot.slane %v1251, 4
        %v1261 = vsel %vm960, 0.0, %v1260
        %v1262 = vrot.slane %v1255, 4
        %v1263 = vsel %vm960, 0.0, %v1262
        %v1264 = vrot.slane %v1199, 4
        %v1265 = vsel %vm960, %v1264, %v907
        %v1266 = vrot.slane %v907, 4
        %v1267 = vsel %vm960, %v1199, %v1266
        %v1269 = vunpack.c.l.s4 1983009808
        %v1270 = vunpack.c.0.s8 %v1269
        %v1271 = vperm.slane %v1265, %v1270
        %v1273 = vunpack.c.l.s4 1983009808
        %v1274 = vunpack.c.0.s8 %v1273
        %v1275 = vperm.slane %v1267, %v1274
        %v1276 = vrot.slane %v1205, 4
        %v1277 = vsel %vm960, %v1276, %v1193
        %v1278 = vrot.slane %v1193, 4
        %v1279 = vsel %vm960, %v1205, %v1278
        %v1281 = vunpack.c.l.s4 1983009808
        %v1282 = vunpack.c.0.s8 %v1281
        %v1283 = vperm.slane %v1277, %v1282
        %v1285 = vunpack.c.l.s4 1983009808
        %v1286 = vunpack.c.0.s8 %v1285
        %v1287 = vperm.slane %v1279, %v1286
        %v1288 = vrot.slane %v1283, 4
        %v1289 = vsel %vm960, %v1288, %v1271
        %v1290 = vrot.slane %v1271, 4
        %v1291 = vsel %vm960, %v1283, %v1290
        %v1293 = vunpack.c.l.s4 1934713408
        %v1294 = vunpack.c.0.s8 %v1293
        %v1295 = vperm.slane %v1289, %v1294
        %v1297 = vunpack.c.l.s4 1934713408
        %v1298 = vunpack.c.0.s8 %v1297
        %v1299 = vperm.slane %v1291, %v1298
        %v1300 = vrot.slane %v1287, 4
        %v1301 = vsel %vm960, %v1300, %v1275
        %v1302 = vrot.slane %v1275, 4
        %v1303 = vsel %vm960, %v1287, %v1302
        %v1305 = vunpack.c.l.s4 1934713408
        %v1306 = vunpack.c.0.s8 %v1305
        %v1307 = vperm.slane %v1301, %v1306
        %v1309 = vunpack.c.l.s4 1934713408
        %v1310 = vunpack.c.0.s8 %v1309
        %v1311 = vperm.slane %v1303, %v1310
        %v1312 = vrot.slane %v1295, 4
        %v1313 = vsel %vm960, 0.0, %v1312
        %v1314 = vrot.slane %v1299, 4
        %v1315 = vsel %vm960, 0.0, %v1314
        %v1316 = vrot.slane %v1307, 4
        %v1317 = vsel %vm960, 0.0, %v1316
        %v1318 = vrot.slane %v1311, 4
        %v1319 = vsel %vm960, 0.0, %v1318
        %v1320 = vsel %vm960, %v1258, %v1239
        %v1322 = vunpack.c.l.s4 1983009808
        %v1323 = vunpack.c.0.s8 %v1322
        %v1324 = vperm.slane %v1320, %v1323
        %v1325 = vrot.slane %v1259, 4
        %v1326 = vsel %vm960, %v1325, %v1257
        %v1328 = vunpack.c.l.s4 1983009808
        %v1329 = vunpack.c.0.s8 %v1328
        %v1330 = vperm.slane %v1326, %v1329
        %v1331 = vsel %vm960, %v1262, %v1251
        %v1333 = vunpack.c.l.s4 1983009808
        %v1334 = vunpack.c.0.s8 %v1333
        %v1335 = vperm.slane %v1331, %v1334
        %v1336 = vrot.slane %v1263, 4
        %v1337 = vsel %vm960, %v1336, %v1261
        %v1339 = vunpack.c.l.s4 1983009808
        %v1340 = vunpack.c.0.s8 %v1339
        %v1341 = vperm.slane %v1337, %v1340
        %v1342 = vrot.slane %v1330, 4
        %v1343 = vsel %vm960, %v1342, %v1324
        %v1344 = vrot.slane %v1324, 4
        %v1345 = vsel %vm960, %v1330, %v1344
        %v1347 = vunpack.c.l.s4 1934713408
        %v1348 = vunpack.c.0.s8 %v1347
        %v1349 = vperm.slane %v1343, %v1348
        %v1351 = vunpack.c.l.s4 1934713408
        %v1352 = vunpack.c.0.s8 %v1351
        %v1353 = vperm.slane %v1345, %v1352
        %v1354 = vrot.slane %v1341, 4
        %v1355 = vsel %vm960, %v1354, %v1335
        %v1356 = vrot.slane %v1335, 4
        %v1357 = vsel %vm960, %v1341, %v1356
        %v1359 = vunpack.c.l.s4 1934713408
        %v1360 = vunpack.c.0.s8 %v1359
        %v1361 = vperm.slane %v1355, %v1360
        %v1363 = vunpack.c.l.s4 1934713408
        %v1364 = vunpack.c.0.s8 %v1363
        %v1365 = vperm.slane %v1357, %v1364
        %v1366 = vrot.slane %v1361, 4
        %v1367 = vsel %vm960, %v1366, %v1349
        %v1368 = vrot.slane %v1349, 4
        %v1369 = vsel %vm960, %v1361, %v1368
        %v1370 = vrot.slane %v1365, 4
        %v1371 = vsel %vm960, %v1370, %v1353
        %v1372 = vrot.slane %v1353, 4
        %v1373 = vsel %vm960, %v1365, %v1372
        %v1374 = vsel %vm960, %v1314, %v1295
        %v1376 = vunpack.c.l.s4 1983009808
        %v1377 = vunpack.c.0.s8 %v1376
        %v1378 = vperm.slane %v1374, %v1377
        %v1379 = vrot.slane %v1315, 4
        %v1380 = vsel %vm960, %v1379, %v1313
        %v1382 = vunpack.c.l.s4 1983009808
        %v1383 = vunpack.c.0.s8 %v1382
        %v1384 = vperm.slane %v1380, %v1383
        %v1385 = vsel %vm960, %v1318, %v1307
        %v1387 = vunpack.c.l.s4 1983009808
        %v1388 = vunpack.c.0.s8 %v1387
        %v1389 = vperm.slane %v1385, %v1388
        %v1390 = vrot.slane %v1319, 4
        %v1391 = vsel %vm960, %v1390, %v1317
        %v1393 = vunpack.c.l.s4 1983009808
        %v1394 = vunpack.c.0.s8 %v1393
        %v1395 = vperm.slane %v1391, %v1394
        %v1396 = vrot.slane %v1384, 4
        %v1397 = vsel %vm960, %v1396, %v1378
        %v1398 = vrot.slane %v1378, 4
        %v1399 = vsel %vm960, %v1384, %v1398
        %v1401 = vunpack.c.l.s4 1934713408
        %v1402 = vunpack.c.0.s8 %v1401
        %v1403 = vperm.slane %v1397, %v1402
        %v1405 = vunpack.c.l.s4 1934713408
        %v1406 = vunpack.c.0.s8 %v1405
        %v1407 = vperm.slane %v1399, %v1406
        %v1408 = vrot.slane %v1395, 4
        %v1409 = vsel %vm960, %v1408, %v1389
        %v1410 = vrot.slane %v1389, 4
        %v1411 = vsel %vm960, %v1395, %v1410
        %v1413 = vunpack.c.l.s4 1934713408
        %v1414 = vunpack.c.0.s8 %v1413
        %v1415 = vperm.slane %v1409, %v1414
        %v1417 = vunpack.c.l.s4 1934713408
        %v1418 = vunpack.c.0.s8 %v1417
        %v1419 = vperm.slane %v1411, %v1418
        %v1420 = vrot.slane %v1415, 4
        %v1421 = vsel %vm960, %v1420, %v1403
        %v1422 = vrot.slane %v1403, 4
        %v1423 = vsel %vm960, %v1415, %v1422
        %v1424 = vrot.slane %v1419, 4
        %v1425 = vsel %vm960, %v1424, %v1407
        %v1426 = vrot.slane %v1407, 4
        %v1427 = vsel %vm960, %v1419, %v1426
        %v1428 = vpack.c.bf16 %v1367, %v1367
        %v1429 = vpack.c.bf16 %v1421, %v1421
        %v1430 = vpack.c.bf16 %v1369, %v1369
        %v1431 = vpack.c.bf16 %v1423, %v1423
        %v1432 = vpack.c.bf16 %v1371, %v1371
        %v1433 = vpack.c.bf16 %v1425, %v1425
        %v1434 = vpack.c.bf16 %v1373, %v1373
        %v1435 = vpack.c.bf16 %v1427, %v1427
        %1438 = vrot.lane.b32.xlu0 %v935, 120
        %v1439 = vpop.permute.xlu0 %1438
        %1440 = vrot.lane.b32.xlu0 %v937, 120
        %v1441 = vpop.permute.xlu0 %1440
        %1444 = vrot.lane.b32.xlu0 %v935, 112
        %v1445 = vpop.permute.xlu0 %1444
        %1446 = vrot.lane.b32.xlu0 %v937, 112
        %v1447 = vpop.permute.xlu0 %1446
        %1450 = vrot.lane.b32.xlu0 %v935, 104
        %v1451 = vpop.permute.xlu0 %1450
        %1452 = vrot.lane.b32.xlu0 %v937, 104
        %v1453 = vpop.permute.xlu0 %1452
        %v1456 = vrot.slane %v1445, 4
        %v1457 = vsel %vm960, %v1456, %v935
        %v1458 = vrot.slane %v935, 4
        %v1459 = vsel %vm960, %v1445, %v1458
        %v1461 = vunpack.c.l.s4 1983009808
        %v1462 = vunpack.c.0.s8 %v1461
        %v1463 = vperm.slane %v1457, %v1462
        %v1465 = vunpack.c.l.s4 1983009808
        %v1466 = vunpack.c.0.s8 %v1465
        %v1467 = vperm.slane %v1459, %v1466
        %v1468 = vrot.slane %v1451, 4
        %v1469 = vsel %vm960, %v1468, %v1439
        %v1470 = vrot.slane %v1439, 4
        %v1471 = vsel %vm960, %v1451, %v1470
        %v1473 = vunpack.c.l.s4 1983009808
        %v1474 = vunpack.c.0.s8 %v1473
        %v1475 = vperm.slane %v1469, %v1474
        %v1477 = vunpack.c.l.s4 1983009808
        %v1478 = vunpack.c.0.s8 %v1477
        %v1479 = vperm.slane %v1471, %v1478
        %v1480 = vrot.slane %v1475, 4
        %v1481 = vsel %vm960, %v1480, %v1463
        %v1482 = vrot.slane %v1463, 4
        %v1483 = vsel %vm960, %v1475, %v1482
        %v1485 = vunpack.c.l.s4 1934713408
        %v1486 = vunpack.c.0.s8 %v1485
        %v1487 = vperm.slane %v1481, %v1486
        %v1489 = vunpack.c.l.s4 1934713408
        %v1490 = vunpack.c.0.s8 %v1489
        %v1491 = vperm.slane %v1483, %v1490
        %v1492 = vrot.slane %v1479, 4
        %v1493 = vsel %vm960, %v1492, %v1467
        %v1494 = vrot.slane %v1467, 4
        %v1495 = vsel %vm960, %v1479, %v1494
        %v1497 = vunpack.c.l.s4 1934713408
        %v1498 = vunpack.c.0.s8 %v1497
        %v1499 = vperm.slane %v1493, %v1498
        %v1501 = vunpack.c.l.s4 1934713408
        %v1502 = vunpack.c.0.s8 %v1501
        %v1503 = vperm.slane %v1495, %v1502
        %v1504 = vrot.slane %v1487, 4
        %v1505 = vsel %vm960, 0.0, %v1504
        %v1506 = vrot.slane %v1491, 4
        %v1507 = vsel %vm960, 0.0, %v1506
        %v1508 = vrot.slane %v1499, 4
        %v1509 = vsel %vm960, 0.0, %v1508
        %v1510 = vrot.slane %v1503, 4
        %v1511 = vsel %vm960, 0.0, %v1510
        %v1512 = vrot.slane %v1447, 4
        %v1513 = vsel %vm960, %v1512, %v937
        %v1514 = vrot.slane %v937, 4
        %v1515 = vsel %vm960, %v1447, %v1514
        %v1517 = vunpack.c.l.s4 1983009808
        %v1518 = vunpack.c.0.s8 %v1517
        %v1519 = vperm.slane %v1513, %v1518
        %v1521 = vunpack.c.l.s4 1983009808
        %v1522 = vunpack.c.0.s8 %v1521
        %v1523 = vperm.slane %v1515, %v1522
        %v1524 = vrot.slane %v1453, 4
        %v1525 = vsel %vm960, %v1524, %v1441
        %v1526 = vrot.slane %v1441, 4
        %v1527 = vsel %vm960, %v1453, %v1526
        %v1529 = vunpack.c.l.s4 1983009808
        %v1530 = vunpack.c.0.s8 %v1529
        %v1531 = vperm.slane %v1525, %v1530
        %v1533 = vunpack.c.l.s4 1983009808
        %v1534 = vunpack.c.0.s8 %v1533
        %v1535 = vperm.slane %v1527, %v1534
        %v1536 = vrot.slane %v1531, 4
        %v1537 = vsel %vm960, %v1536, %v1519
        %v1538 = vrot.slane %v1519, 4
        %v1539 = vsel %vm960, %v1531, %v1538
        %v1541 = vunpack.c.l.s4 1934713408
        %v1542 = vunpack.c.0.s8 %v1541
        %v1543 = vperm.slane %v1537, %v1542
        %v1545 = vunpack.c.l.s4 1934713408
        %v1546 = vunpack.c.0.s8 %v1545
        %v1547 = vperm.slane %v1539, %v1546
        %v1548 = vrot.slane %v1535, 4
        %v1549 = vsel %vm960, %v1548, %v1523
        %v1550 = vrot.slane %v1523, 4
        %v1551 = vsel %vm960, %v1535, %v1550
        %v1553 = vunpack.c.l.s4 1934713408
        %v1554 = vunpack.c.0.s8 %v1553
        %v1555 = vperm.slane %v1549, %v1554
        %v1557 = vunpack.c.l.s4 1934713408
        %v1558 = vunpack.c.0.s8 %v1557
        %v1559 = vperm.slane %v1551, %v1558
        %v1560 = vrot.slane %v1543, 4
        %v1561 = vsel %vm960, 0.0, %v1560
        %v1562 = vrot.slane %v1547, 4
        %v1563 = vsel %vm960, 0.0, %v1562
        %v1564 = vrot.slane %v1555, 4
        %v1565 = vsel %vm960, 0.0, %v1564
        %v1566 = vrot.slane %v1559, 4
        %v1567 = vsel %vm960, 0.0, %v1566
        %v1568 = vsel %vm960, %v1506, %v1487
        %v1570 = vunpack.c.l.s4 1983009808
        %v1571 = vunpack.c.0.s8 %v1570
        %v1572 = vperm.slane %v1568, %v1571
        %v1573 = vrot.slane %v1507, 4
        %v1574 = vsel %vm960, %v1573, %v1505
        %v1576 = vunpack.c.l.s4 1983009808
        %v1577 = vunpack.c.0.s8 %v1576
        %v1578 = vperm.slane %v1574, %v1577
        %v1579 = vsel %vm960, %v1510, %v1499
        %v1581 = vunpack.c.l.s4 1983009808
        %v1582 = vunpack.c.0.s8 %v1581
        %v1583 = vperm.slane %v1579, %v1582
        %v1584 = vrot.slane %v1511, 4
        %v1585 = vsel %vm960, %v1584, %v1509
        %v1587 = vunpack.c.l.s4 1983009808
        %v1588 = vunpack.c.0.s8 %v1587
        %v1589 = vperm.slane %v1585, %v1588
        %v1590 = vrot.slane %v1578, 4
        %v1591 = vsel %vm960, %v1590, %v1572
        %v1592 = vrot.slane %v1572, 4
        %v1593 = vsel %vm960, %v1578, %v1592
        %v1595 = vunpack.c.l.s4 1934713408
        %v1596 = vunpack.c.0.s8 %v1595
        %v1597 = vperm.slane %v1591, %v1596
        %v1599 = vunpack.c.l.s4 1934713408
        %v1600 = vunpack.c.0.s8 %v1599
        %v1601 = vperm.slane %v1593, %v1600
        %v1602 = vrot.slane %v1589, 4
        %v1603 = vsel %vm960, %v1602, %v1583
        %v1604 = vrot.slane %v1583, 4
        %v1605 = vsel %vm960, %v1589, %v1604
        %v1607 = vunpack.c.l.s4 1934713408
        %v1608 = vunpack.c.0.s8 %v1607
        %v1609 = vperm.slane %v1603, %v1608
        %v1611 = vunpack.c.l.s4 1934713408
        %v1612 = vunpack.c.0.s8 %v1611
        %v1613 = vperm.slane %v1605, %v1612
        %v1614 = vrot.slane %v1609, 4
        %v1615 = vsel %vm960, %v1614, %v1597
        %v1616 = vrot.slane %v1597, 4
        %v1617 = vsel %vm960, %v1609, %v1616
        %v1618 = vrot.slane %v1613, 4
        %v1619 = vsel %vm960, %v1618, %v1601
        %v1620 = vrot.slane %v1601, 4
        %v1621 = vsel %vm960, %v1613, %v1620
        %v1622 = vsel %vm960, %v1562, %v1543
        %v1624 = vunpack.c.l.s4 1983009808
        %v1625 = vunpack.c.0.s8 %v1624
        %v1626 = vperm.slane %v1622, %v1625
        %v1627 = vrot.slane %v1563, 4
        %v1628 = vsel %vm960, %v1627, %v1561
        %v1630 = vunpack.c.l.s4 1983009808
        %v1631 = vunpack.c.0.s8 %v1630
        %v1632 = vperm.slane %v1628, %v1631
        %v1633 = vsel %vm960, %v1566, %v1555
        %v1635 = vunpack.c.l.s4 1983009808
        %v1636 = vunpack.c.0.s8 %v1635
        %v1637 = vperm.slane %v1633, %v1636
        %v1638 = vrot.slane %v1567, 4
        %v1639 = vsel %vm960, %v1638, %v1565
        %v1641 = vunpack.c.l.s4 1983009808
        %v1642 = vunpack.c.0.s8 %v1641
        %v1643 = vperm.slane %v1639, %v1642
        %v1644 = vrot.slane %v1632, 4
        %v1645 = vsel %vm960, %v1644, %v1626
        %v1646 = vrot.slane %v1626, 4
        %v1647 = vsel %vm960, %v1632, %v1646
        %v1649 = vunpack.c.l.s4 1934713408
        %v1650 = vunpack.c.0.s8 %v1649
        %v1651 = vperm.slane %v1645, %v1650
        %v1653 = vunpack.c.l.s4 1934713408
        %v1654 = vunpack.c.0.s8 %v1653
        %v1655 = vperm.slane %v1647, %v1654
        %v1656 = vrot.slane %v1643, 4
        %v1657 = vsel %vm960, %v1656, %v1637
        %v1658 = vrot.slane %v1637, 4
        %v1659 = vsel %vm960, %v1643, %v1658
        %v1661 = vunpack.c.l.s4 1934713408
        %v1662 = vunpack.c.0.s8 %v1661
        %v1663 = vperm.slane %v1657, %v1662
        %v1665 = vunpack.c.l.s4 1934713408
        %v1666 = vunpack.c.0.s8 %v1665
        %v1667 = vperm.slane %v1659, %v1666
        %v1668 = vrot.slane %v1663, 4
        %v1669 = vsel %vm960, %v1668, %v1651
        %v1670 = vrot.slane %v1651, 4
        %v1671 = vsel %vm960, %v1663, %v1670
        %v1672 = vrot.slane %v1667, 4
        %v1673 = vsel %vm960, %v1672, %v1655
        %v1674 = vrot.slane %v1655, 4
        %v1675 = vsel %vm960, %v1667, %v1674
        %v1676 = vpack.c.bf16 %v1615, %v1615
        %v1677 = vpack.c.bf16 %v1669, %v1669
        %v1678 = vpack.c.bf16 %v1617, %v1617
        %v1679 = vpack.c.bf16 %v1671, %v1671
        %v1680 = vpack.c.bf16 %v1619, %v1619
        %v1681 = vpack.c.bf16 %v1673, %v1673
        %v1682 = vpack.c.bf16 %v1621, %v1621
        %v1683 = vpack.c.bf16 %v1675, %v1675
        %vm1684 = vcmask 64512
        %v1686 = vsel %vm1684, %v1180, 0
        %v1689 = vsel %vm1684, %v1428, 0
        %1691 = vmatpush.bf16.xpose.msra.mxu0 0
        %1692 = vmatpush.bf16.xpose.msra.mxu0 0
        %1693 = vmatpush.bf16.xpose.msra.mxu0 0
        %1694 = vmatpush.bf16.xpose.msra.mxu0 0
        %1695 = vmatpush.bf16.xpose.msra.mxu0 0
        %1696 = vmatpush.bf16.xpose.msra.mxu0 0
        %1697 = vmatpush.bf16.xpose.msra.mxu0 0
        %1698 = vmatpush.bf16.xpose.msra.mxu0 %v1689
        %1699 = vmatmul.bf16.gmra.mxu0 %v1686
        %v1700 = vpop.f32.mrf.mxu0
        %v1701 = vadd.f32 0.0, %v1700
        %v1702 = vpop.f32.mrf.mxu0
        %1703 = vdwg.mxu0
        %v1705 = vsel %vm1684, %v1181, 0
        %v1708 = vsel %vm1684, %v1429, 0
        %1710 = vmatpush.bf16.xpose.msra.mxu0 0
        %1711 = vmatpush.bf16.xpose.msra.mxu0 0
        %1712 = vmatpush.bf16.xpose.msra.mxu0 0
        %1713 = vmatpush.bf16.xpose.msra.mxu0 0
        %1714 = vmatpush.bf16.xpose.msra.mxu0 0
        %1715 = vmatpush.bf16.xpose.msra.mxu0 0
        %1716 = vmatpush.bf16.xpose.msra.mxu0 0
        %1717 = vmatpush.bf16.xpose.msra.mxu0 %v1708
        %1718 = vmatmul.bf16.gmra.mxu0 %v1705
        %v1719 = vpop.f32.mrf.mxu0
        %v1720 = vadd.f32 0.0, %v1719
        %v1721 = vpop.f32.mrf.mxu0
        %1722 = vdwg.mxu0
        %v1724 = vsel %vm1684, %v1182, 0
        %v1727 = vsel %vm1684, %v1430, 0
        %1729 = vmatpush.bf16.xpose.msra.mxu0 0
        %1730 = vmatpush.bf16.xpose.msra.mxu0 0
        %1731 = vmatpush.bf16.xpose.msra.mxu0 0
        %1732 = vmatpush.bf16.xpose.msra.mxu0 0
        %1733 = vmatpush.bf16.xpose.msra.mxu0 0
        %1734 = vmatpush.bf16.xpose.msra.mxu0 0
        %1735 = vmatpush.bf16.xpose.msra.mxu0 0
        %1736 = vmatpush.bf16.xpose.msra.mxu0 %v1727
        %1737 = vmatmul.bf16.gmra.mxu0 %v1724
        %v1738 = vpop.f32.mrf.mxu0
        %v1739 = vadd.f32 0.0, %v1738
        %v1740 = vpop.f32.mrf.mxu0
        %1741 = vdwg.mxu0
        %v1743 = vsel %vm1684, %v1183, 0
        %v1746 = vsel %vm1684, %v1431, 0
        %1748 = vmatpush.bf16.xpose.msra.mxu0 0
        %1749 = vmatpush.bf16.xpose.msra.mxu0 0
        %1750 = vmatpush.bf16.xpose.msra.mxu0 0
        %1751 = vmatpush.bf16.xpose.msra.mxu0 0
        %1752 = vmatpush.bf16.xpose.msra.mxu0 0
        %1753 = vmatpush.bf16.xpose.msra.mxu0 0
        %1754 = vmatpush.bf16.xpose.msra.mxu0 0
        %1755 = vmatpush.bf16.xpose.msra.mxu0 %v1746
        %1756 = vmatmul.bf16.gmra.mxu0 %v1743
        %v1757 = vpop.f32.mrf.mxu0
        %v1758 = vadd.f32 0.0, %v1757
        %v1759 = vpop.f32.mrf.mxu0
        %1760 = vdwg.mxu0
        %v1762 = vsel %vm1684, %v1184, 0
        %v1765 = vsel %vm1684, %v1432, 0
        %1767 = vmatpush.bf16.xpose.msra.mxu0 0
        %1768 = vmatpush.bf16.xpose.msra.mxu0 0
        %1769 = vmatpush.bf16.xpose.msra.mxu0 0
        %1770 = vmatpush.bf16.xpose.msra.mxu0 0
        %1771 = vmatpush.bf16.xpose.msra.mxu0 0
        %1772 = vmatpush.bf16.xpose.msra.mxu0 0
        %1773 = vmatpush.bf16.xpose.msra.mxu0 0
        %1774 = vmatpush.bf16.xpose.msra.mxu0 %v1765
        %1775 = vmatmul.bf16.gmra.mxu0 %v1762
        %v1776 = vpop.f32.mrf.mxu0
        %v1777 = vadd.f32 0.0, %v1776
        %v1778 = vpop.f32.mrf.mxu0
        %1779 = vdwg.mxu0
        %v1781 = vsel %vm1684, %v1185, 0
        %v1784 = vsel %vm1684, %v1433, 0
        %1786 = vmatpush.bf16.xpose.msra.mxu0 0
        %1787 = vmatpush.bf16.xpose.msra.mxu0 0
        %1788 = vmatpush.bf16.xpose.msra.mxu0 0
        %1789 = vmatpush.bf16.xpose.msra.mxu0 0
        %1790 = vmatpush.bf16.xpose.msra.mxu0 0
        %1791 = vmatpush.bf16.xpose.msra.mxu0 0
        %1792 = vmatpush.bf16.xpose.msra.mxu0 0
        %1793 = vmatpush.bf16.xpose.msra.mxu0 %v1784
        %1794 = vmatmul.bf16.gmra.mxu0 %v1781
        %v1795 = vpop.f32.mrf.mxu0
        %v1796 = vadd.f32 0.0, %v1795
        %v1797 = vpop.f32.mrf.mxu0
        %1798 = vdwg.mxu0
        %v1800 = vsel %vm1684, %v1186, 0
        %v1803 = vsel %vm1684, %v1434, 0
        %1805 = vmatpush.bf16.xpose.msra.mxu0 0
        %1806 = vmatpush.bf16.xpose.msra.mxu0 0
        %1807 = vmatpush.bf16.xpose.msra.mxu0 0
        %1808 = vmatpush.bf16.xpose.msra.mxu0 0
        %1809 = vmatpush.bf16.xpose.msra.mxu0 0
        %1810 = vmatpush.bf16.xpose.msra.mxu0 0
        %1811 = vmatpush.bf16.xpose.msra.mxu0 0
        %1812 = vmatpush.bf16.xpose.msra.mxu0 %v1803
        %1813 = vmatmul.bf16.gmra.mxu0 %v1800
        %v1814 = vpop.f32.mrf.mxu0
        %v1815 = vadd.f32 0.0, %v1814
        %v1816 = vpop.f32.mrf.mxu0
        %1817 = vdwg.mxu0
        %v1819 = vsel %vm1684, %v1187, 0
        %v1822 = vsel %vm1684, %v1435, 0
        %1824 = vmatpush.bf16.xpose.msra.mxu0 0
        %1825 = vmatpush.bf16.xpose.msra.mxu0 0
        %1826 = vmatpush.bf16.xpose.msra.mxu0 0
        %1827 = vmatpush.bf16.xpose.msra.mxu0 0
        %1828 = vmatpush.bf16.xpose.msra.mxu0 0
        %1829 = vmatpush.bf16.xpose.msra.mxu0 0
        %1830 = vmatpush.bf16.xpose.msra.mxu0 0
        %1831 = vmatpush.bf16.xpose.msra.mxu0 %v1822
        %1832 = vmatmul.bf16.gmra.mxu0 %v1819
        %v1833 = vpop.f32.mrf.mxu0
        %v1834 = vadd.f32 0.0, %v1833
        %v1835 = vpop.f32.mrf.mxu0
        %1836 = vdwg.mxu0
        %v1837 = vsel %vm1684, %v1701, -inf
        %1838 = vmax.xlane.f32.xlu0 %v1837
        %v1839 = vpop.xlane.xlu0 %1838
        %v1840 = vsel %vm1684, %v1720, -inf
        %1841 = vmax.xlane.f32.xlu0 %v1840
        %v1842 = vpop.xlane.xlu0 %1841
        %v1843 = vsel %vm1684, %v1739, -inf
        %1844 = vmax.xlane.f32.xlu0 %v1843
        %v1845 = vpop.xlane.xlu0 %1844
        %v1846 = vsel %vm1684, %v1758, -inf
        %1847 = vmax.xlane.f32.xlu0 %v1846
        %v1848 = vpop.xlane.xlu0 %1847
        %v1849 = vsel %vm1684, %v1777, -inf
        %1850 = vmax.xlane.f32.xlu0 %v1849
        %v1851 = vpop.xlane.xlu0 %1850
        %v1852 = vsel %vm1684, %v1796, -inf
        %1853 = vmax.xlane.f32.xlu0 %v1852
        %v1854 = vpop.xlane.xlu0 %1853
        %v1855 = vsel %vm1684, %v1815, -inf
        %1856 = vmax.xlane.f32.xlu0 %v1855
        %v1857 = vpop.xlane.xlu0 %1856
        %v1858 = vsel %vm1684, %v1834, -inf
        %1859 = vmax.xlane.f32.xlu0 %v1858
        %v1860 = vpop.xlane.xlu0 %1859
        %v1861 = vsub.f32 %v1701, %v1839
        %v1862 = vsub.f32 %v1720, %v1842
        %v1863 = vsub.f32 %v1739, %v1845
        %v1864 = vsub.f32 %v1758, %v1848
        %v1865 = vsub.f32 %v1777, %v1851
        %v1866 = vsub.f32 %v1796, %v1854
        %v1867 = vsub.f32 %v1815, %v1857
        %v1868 = vsub.f32 %v1834, %v1860
        %v1869 = vmul.f32 %v1861, 1.442695
        %v1870 = vpow.pop %v1869
        %v1871 = vmul.f32 %v1862, 1.442695
        %v1872 = vpow.pop %v1871
        %v1873 = vmul.f32 %v1863, 1.442695
        %v1874 = vpow.pop %v1873
        %v1875 = vmul.f32 %v1864, 1.442695
        %v1876 = vpow.pop %v1875
        %v1877 = vmul.f32 %v1865, 1.442695
        %v1878 = vpow.pop %v1877
        %v1879 = vmul.f32 %v1866, 1.442695
        %v1880 = vpow.pop %v1879
        %v1881 = vmul.f32 %v1867, 1.442695
        %v1882 = vpow.pop %v1881
        %v1883 = vmul.f32 %v1868, 1.442695
        %v1884 = vpow.pop %v1883
        %v1885 = vsel %vm1684, %v1870, 0.0
        %1886 = vadd.xlane.f32.xlu0 %v1885
        %v1887 = vpop.xlane.xlu0 %1886
        %v1888 = vsel %vm1684, %v1872, 0.0
        %1889 = vadd.xlane.f32.xlu0 %v1888
        %v1890 = vpop.xlane.xlu0 %1889
        %v1891 = vsel %vm1684, %v1874, 0.0
        %1892 = vadd.xlane.f32.xlu0 %v1891
        %v1893 = vpop.xlane.xlu0 %1892
        %v1894 = vsel %vm1684, %v1876, 0.0
        %1895 = vadd.xlane.f32.xlu0 %v1894
        %v1896 = vpop.xlane.xlu0 %1895
        %v1897 = vsel %vm1684, %v1878, 0.0
        %1898 = vadd.xlane.f32.xlu0 %v1897
        %v1899 = vpop.xlane.xlu0 %1898
        %v1900 = vsel %vm1684, %v1880, 0.0
        %1901 = vadd.xlane.f32.xlu0 %v1900
        %v1902 = vpop.xlane.xlu0 %1901
        %v1903 = vsel %vm1684, %v1882, 0.0
        %1904 = vadd.xlane.f32.xlu0 %v1903
        %v1905 = vpop.xlane.xlu0 %1904
        %v1906 = vsel %vm1684, %v1884, 0.0
        %1907 = vadd.xlane.f32.xlu0 %v1906
        %v1908 = vpop.xlane.xlu0 %1907
        %v1909 = vrcp.pop %v1887
        %v1910 = vrcp.pop %v1890
        %v1911 = vrcp.pop %v1893
        %v1912 = vrcp.pop %v1896
        %v1913 = vrcp.pop %v1899
        %v1914 = vrcp.pop %v1902
        %v1915 = vrcp.pop %v1905
        %v1916 = vrcp.pop %v1908
        %v1917 = vmul.f32 %v1870, %v1909
        %v1918 = vmul.f32 %v1872, %v1910
        %v1919 = vmul.f32 %v1874, %v1911
        %v1920 = vmul.f32 %v1876, %v1912
        %v1921 = vmul.f32 %v1878, %v1913
        %v1922 = vmul.f32 %v1880, %v1914
        %v1923 = vmul.f32 %v1882, %v1915
        %v1924 = vmul.f32 %v1884, %v1916
        %v1925 = vpack.c.bf16 %v1917, %v1917
        %v1926 = vpack.c.bf16 %v1918, %v1918
        %v1927 = vpack.c.bf16 %v1919, %v1919
        %v1928 = vpack.c.bf16 %v1920, %v1920
        %v1929 = vpack.c.bf16 %v1921, %v1921
        %v1930 = vpack.c.bf16 %v1922, %v1922
        %v1931 = vpack.c.bf16 %v1923, %v1923
        %v1932 = vpack.c.bf16 %v1924, %v1924
        %v1934 = vsel %vm1684, %v1925, 0
        %vm1936 = vcmask 1043456
        %v1938 = vsel %vm1936, %v1676, 0
        %1940 = vmatpush.bf16.msra.mxu0 0
        %1941 = vmatpush.bf16.msra.mxu0 0
        %1942 = vmatpush.bf16.msra.mxu0 0
        %1943 = vmatpush.bf16.msra.mxu0 0
        %1944 = vmatpush.bf16.msra.mxu0 0
        %1945 = vmatpush.bf16.msra.mxu0 0
        %1946 = vmatpush.bf16.msra.mxu0 0
        %1947 = vmatpush.bf16.msra.mxu0 %v1938
        %1948 = vmatmul.bf16.gmra.mxu0 %v1934
        %v1949 = vpop.f32.mrf.mxu0
        %v1950 = vadd.f32 0.0, %v1949
        %v1951 = vpop.f32.mrf.mxu0
        %1952 = vdwg.mxu0
        %v1954 = vsel %vm1684, %v1926, 0
        %v1957 = vsel %vm1936, %v1677, 0
        %1959 = vmatpush.bf16.msra.mxu0 0
        %1960 = vmatpush.bf16.msra.mxu0 0
        %1961 = vmatpush.bf16.msra.mxu0 0
        %1962 = vmatpush.bf16.msra.mxu0 0
        %1963 = vmatpush.bf16.msra.mxu0 0
        %1964 = vmatpush.bf16.msra.mxu0 0
        %1965 = vmatpush.bf16.msra.mxu0 0
        %1966 = vmatpush.bf16.msra.mxu0 %v1957
        %1967 = vmatmul.bf16.gmra.mxu0 %v1954
        %v1968 = vpop.f32.mrf.mxu0
        %v1969 = vadd.f32 0.0, %v1968
        %v1970 = vpop.f32.mrf.mxu0
        %1971 = vdwg.mxu0
        %v1973 = vsel %vm1684, %v1927, 0
        %v1976 = vsel %vm1936, %v1678, 0
        %1978 = vmatpush.bf16.msra.mxu0 0
        %1979 = vmatpush.bf16.msra.mxu0 0
        %1980 = vmatpush.bf16.msra.mxu0 0
        %1981 = vmatpush.bf16.msra.mxu0 0
        %1982 = vmatpush.bf16.msra.mxu0 0
        %1983 = vmatpush.bf16.msra.mxu0 0
        %1984 = vmatpush.bf16.msra.mxu0 0
        %1985 = vmatpush.bf16.msra.mxu0 %v1976
        %1986 = vmatmul.bf16.gmra.mxu0 %v1973
        %v1987 = vpop.f32.mrf.mxu0
        %v1988 = vadd.f32 0.0, %v1987
        %v1989 = vpop.f32.mrf.mxu0
        %1990 = vdwg.mxu0
        %v1992 = vsel %vm1684, %v1928, 0
        %v1995 = vsel %vm1936, %v1679, 0
        %1997 = vmatpush.bf16.msra.mxu0 0
        %1998 = vmatpush.bf16.msra.mxu0 0
        %1999 = vmatpush.bf16.msra.mxu0 0
        %2000 = vmatpush.bf16.msra.mxu0 0
        %2001 = vmatpush.bf16.msra.mxu0 0
        %2002 = vmatpush.bf16.msra.mxu0 0
        %2003 = vmatpush.bf16.msra.mxu0 0
        %2004 = vmatpush.bf16.msra.mxu0 %v1995
        %2005 = vmatmul.bf16.gmra.mxu0 %v1992
        %v2006 = vpop.f32.mrf.mxu0
        %v2007 = vadd.f32 0.0, %v2006
        %v2008 = vpop.f32.mrf.mxu0
        %2009 = vdwg.mxu0
        %v2011 = vsel %vm1684, %v1929, 0
        %v2014 = vsel %vm1936, %v1680, 0
        %2016 = vmatpush.bf16.msra.mxu0 0
        %2017 = vmatpush.bf16.msra.mxu0 0
        %2018 = vmatpush.bf16.msra.mxu0 0
        %2019 = vmatpush.bf16.msra.mxu0 0
        %2020 = vmatpush.bf16.msra.mxu0 0
        %2021 = vmatpush.bf16.msra.mxu0 0
        %2022 = vmatpush.bf16.msra.mxu0 0
        %2023 = vmatpush.bf16.msra.mxu0 %v2014
        %2024 = vmatmul.bf16.gmra.mxu0 %v2011
        %v2025 = vpop.f32.mrf.mxu0
        %v2026 = vadd.f32 0.0, %v2025
        %v2027 = vpop.f32.mrf.mxu0
        %2028 = vdwg.mxu0
        %v2030 = vsel %vm1684, %v1930, 0
        %v2033 = vsel %vm1936, %v1681, 0
        %2035 = vmatpush.bf16.msra.mxu0 0
        %2036 = vmatpush.bf16.msra.mxu0 0
        %2037 = vmatpush.bf16.msra.mxu0 0
        %2038 = vmatpush.bf16.msra.mxu0 0
        %2039 = vmatpush.bf16.msra.mxu0 0
        %2040 = vmatpush.bf16.msra.mxu0 0
        %2041 = vmatpush.bf16.msra.mxu0 0
        %2042 = vmatpush.bf16.msra.mxu0 %v2033
        %2043 = vmatmul.bf16.gmra.mxu0 %v2030
        %v2044 = vpop.f32.mrf.mxu0
        %v2045 = vadd.f32 0.0, %v2044
        %v2046 = vpop.f32.mrf.mxu0
        %2047 = vdwg.mxu0
        %v2049 = vsel %vm1684, %v1931, 0
        %v2052 = vsel %vm1936, %v1682, 0
        %2054 = vmatpush.bf16.msra.mxu0 0
        %2055 = vmatpush.bf16.msra.mxu0 0
        %2056 = vmatpush.bf16.msra.mxu0 0
        %2057 = vmatpush.bf16.msra.mxu0 0
        %2058 = vmatpush.bf16.msra.mxu0 0
        %2059 = vmatpush.bf16.msra.mxu0 0
        %2060 = vmatpush.bf16.msra.mxu0 0
        %2061 = vmatpush.bf16.msra.mxu0 %v2052
        %2062 = vmatmul.bf16.gmra.mxu0 %v2049
        %v2063 = vpop.f32.mrf.mxu0
        %v2064 = vadd.f32 0.0, %v2063
        %v2065 = vpop.f32.mrf.mxu0
        %2066 = vdwg.mxu0
        %v2068 = vsel %vm1684, %v1932, 0
        %v2071 = vsel %vm1936, %v1683, 0
        %2073 = vmatpush.bf16.msra.mxu0 0
        %2074 = vmatpush.bf16.msra.mxu0 0
        %2075 = vmatpush.bf16.msra.mxu0 0
        %2076 = vmatpush.bf16.msra.mxu0 0
        %2077 = vmatpush.bf16.msra.mxu0 0
        %2078 = vmatpush.bf16.msra.mxu0 0
        %2079 = vmatpush.bf16.msra.mxu0 0
        %2080 = vmatpush.bf16.msra.mxu0 %v2071
        %2081 = vmatmul.bf16.gmra.mxu0 %v2068
        %v2082 = vpop.f32.mrf.mxu0
        %v2083 = vadd.f32 0.0, %v2082
        %v2084 = vpop.f32.mrf.mxu0
        %2085 = vdwg.mxu0
        %v2086 = vrot.slane %v2026, 4
        %v2087 = vsel %vm960, %v2086, %v1950
        %v2088 = vrot.slane %v1950, 4
        %v2089 = vsel %vm960, %v2026, %v2088
        %v2091 = vunpack.c.l.s4 1983009808
        %v2092 = vunpack.c.0.s8 %v2091
        %v2093 = vperm.slane %v2087, %v2092
        %v2095 = vunpack.c.l.s4 1983009808
        %v2096 = vunpack.c.0.s8 %v2095
        %v2097 = vperm.slane %v2089, %v2096
        %v2098 = vrot.slane %v2064, 4
        %v2099 = vsel %vm960, %v2098, %v1988
        %v2100 = vrot.slane %v1988, 4
        %v2101 = vsel %vm960, %v2064, %v2100
        %v2103 = vunpack.c.l.s4 1983009808
        %v2104 = vunpack.c.0.s8 %v2103
        %v2105 = vperm.slane %v2099, %v2104
        %v2107 = vunpack.c.l.s4 1983009808
        %v2108 = vunpack.c.0.s8 %v2107
        %v2109 = vperm.slane %v2101, %v2108
        %v2110 = vrot.slane %v2105, 4
        %v2111 = vsel %vm960, %v2110, %v2093
        %v2112 = vrot.slane %v2093, 4
        %v2113 = vsel %vm960, %v2105, %v2112
        %v2115 = vunpack.c.l.s4 1934713408
        %v2116 = vunpack.c.0.s8 %v2115
        %v2117 = vperm.slane %v2111, %v2116
        %v2119 = vunpack.c.l.s4 1934713408
        %v2120 = vunpack.c.0.s8 %v2119
        %v2121 = vperm.slane %v2113, %v2120
        %v2122 = vrot.slane %v2109, 4
        %v2123 = vsel %vm960, %v2122, %v2097
        %v2124 = vrot.slane %v2097, 4
        %v2125 = vsel %vm960, %v2109, %v2124
        %v2127 = vunpack.c.l.s4 1934713408
        %v2128 = vunpack.c.0.s8 %v2127
        %v2129 = vperm.slane %v2123, %v2128
        %v2131 = vunpack.c.l.s4 1934713408
        %v2132 = vunpack.c.0.s8 %v2131
        %v2133 = vperm.slane %v2125, %v2132
        %v2134 = vrot.slane %v2117, 4
        %v2135 = vsel %vm960, 0.0, %v2134
        %v2136 = vrot.slane %v2121, 4
        %v2137 = vsel %vm960, 0.0, %v2136
        %v2138 = vrot.slane %v2129, 4
        %v2139 = vsel %vm960, 0.0, %v2138
        %v2140 = vrot.slane %v2133, 4
        %v2141 = vsel %vm960, 0.0, %v2140
        %v2142 = vrot.slane %v2045, 4
        %v2143 = vsel %vm960, %v2142, %v1969
        %v2144 = vrot.slane %v1969, 4
        %v2145 = vsel %vm960, %v2045, %v2144
        %v2147 = vunpack.c.l.s4 1983009808
        %v2148 = vunpack.c.0.s8 %v2147
        %v2149 = vperm.slane %v2143, %v2148
        %v2151 = vunpack.c.l.s4 1983009808
        %v2152 = vunpack.c.0.s8 %v2151
        %v2153 = vperm.slane %v2145, %v2152
        %v2154 = vrot.slane %v2083, 4
        %v2155 = vsel %vm960, %v2154, %v2007
        %v2156 = vrot.slane %v2007, 4
        %v2157 = vsel %vm960, %v2083, %v2156
        %v2159 = vunpack.c.l.s4 1983009808
        %v2160 = vunpack.c.0.s8 %v2159
        %v2161 = vperm.slane %v2155, %v2160
        %v2163 = vunpack.c.l.s4 1983009808
        %v2164 = vunpack.c.0.s8 %v2163
        %v2165 = vperm.slane %v2157, %v2164
        %v2166 = vrot.slane %v2161, 4
        %v2167 = vsel %vm960, %v2166, %v2149
        %v2168 = vrot.slane %v2149, 4
        %v2169 = vsel %vm960, %v2161, %v2168
        %v2171 = vunpack.c.l.s4 1934713408
        %v2172 = vunpack.c.0.s8 %v2171
        %v2173 = vperm.slane %v2167, %v2172
        %v2175 = vunpack.c.l.s4 1934713408
        %v2176 = vunpack.c.0.s8 %v2175
        %v2177 = vperm.slane %v2169, %v2176
        %v2178 = vrot.slane %v2165, 4
        %v2179 = vsel %vm960, %v2178, %v2153
        %v2180 = vrot.slane %v2153, 4
        %v2181 = vsel %vm960, %v2165, %v2180
        %v2183 = vunpack.c.l.s4 1934713408
        %v2184 = vunpack.c.0.s8 %v2183
        %v2185 = vperm.slane %v2179, %v2184
        %v2187 = vunpack.c.l.s4 1934713408
        %v2188 = vunpack.c.0.s8 %v2187
        %v2189 = vperm.slane %v2181, %v2188
        %v2190 = vrot.slane %v2173, 4
        %v2191 = vsel %vm960, 0.0, %v2190
        %v2192 = vrot.slane %v2177, 4
        %v2193 = vsel %vm960, 0.0, %v2192
        %v2194 = vrot.slane %v2185, 4
        %v2195 = vsel %vm960, 0.0, %v2194
        %v2196 = vrot.slane %v2189, 4
        %v2197 = vsel %vm960, 0.0, %v2196
        %v2198 = vsel %vm960, %v2136, %v2117
        %v2200 = vunpack.c.l.s4 1983009808
        %v2201 = vunpack.c.0.s8 %v2200
        %v2202 = vperm.slane %v2198, %v2201
        %v2203 = vrot.slane %v2137, 4
        %v2204 = vsel %vm960, %v2203, %v2135
        %v2206 = vunpack.c.l.s4 1983009808
        %v2207 = vunpack.c.0.s8 %v2206
        %v2208 = vperm.slane %v2204, %v2207
        %v2209 = vsel %vm960, %v2140, %v2129
        %v2211 = vunpack.c.l.s4 1983009808
        %v2212 = vunpack.c.0.s8 %v2211
        %v2213 = vperm.slane %v2209, %v2212
        %v2214 = vrot.slane %v2141, 4
        %v2215 = vsel %vm960, %v2214, %v2139
        %v2217 = vunpack.c.l.s4 1983009808
        %v2218 = vunpack.c.0.s8 %v2217
        %v2219 = vperm.slane %v2215, %v2218
        %v2220 = vrot.slane %v2208, 4
        %v2221 = vsel %vm960, %v2220, %v2202
        %v2222 = vrot.slane %v2202, 4
        %v2223 = vsel %vm960, %v2208, %v2222
        %v2225 = vunpack.c.l.s4 1934713408
        %v2226 = vunpack.c.0.s8 %v2225
        %v2227 = vperm.slane %v2221, %v2226
        %v2229 = vunpack.c.l.s4 1934713408
        %v2230 = vunpack.c.0.s8 %v2229
        %v2231 = vperm.slane %v2223, %v2230
        %v2232 = vrot.slane %v2219, 4
        %v2233 = vsel %vm960, %v2232, %v2213
        %v2234 = vrot.slane %v2213, 4
        %v2235 = vsel %vm960, %v2219, %v2234
        %v2237 = vunpack.c.l.s4 1934713408
        %v2238 = vunpack.c.0.s8 %v2237
        %v2239 = vperm.slane %v2233, %v2238
        %v2241 = vunpack.c.l.s4 1934713408
        %v2242 = vunpack.c.0.s8 %v2241
        %v2243 = vperm.slane %v2235, %v2242
        %v2244 = vrot.slane %v2239, 4
        %v2245 = vsel %vm960, %v2244, %v2227
        %v2246 = vrot.slane %v2227, 4
        %v2247 = vsel %vm960, %v2239, %v2246
        %v2248 = vrot.slane %v2243, 4
        %v2249 = vsel %vm960, %v2248, %v2231
        %v2250 = vrot.slane %v2231, 4
        %v2251 = vsel %vm960, %v2243, %v2250
        %v2252 = vsel %vm960, %v2192, %v2173
        %v2254 = vunpack.c.l.s4 1983009808
        %v2255 = vunpack.c.0.s8 %v2254
        %v2256 = vperm.slane %v2252, %v2255
        %v2257 = vrot.slane %v2193, 4
        %v2258 = vsel %vm960, %v2257, %v2191
        %v2260 = vunpack.c.l.s4 1983009808
        %v2261 = vunpack.c.0.s8 %v2260
        %v2262 = vperm.slane %v2258, %v2261
        %v2263 = vsel %vm960, %v2196, %v2185
        %v2265 = vunpack.c.l.s4 1983009808
        %v2266 = vunpack.c.0.s8 %v2265
        %v2267 = vperm.slane %v2263, %v2266
        %v2268 = vrot.slane %v2197, 4
        %v2269 = vsel %vm960, %v2268, %v2195
        %v2271 = vunpack.c.l.s4 1983009808
        %v2272 = vunpack.c.0.s8 %v2271
        %v2273 = vperm.slane %v2269, %v2272
        %v2274 = vrot.slane %v2262, 4
        %v2275 = vsel %vm960, %v2274, %v2256
        %v2276 = vrot.slane %v2256, 4
        %v2277 = vsel %vm960, %v2262, %v2276
        %v2279 = vunpack.c.l.s4 1934713408
        %v2280 = vunpack.c.0.s8 %v2279
        %v2281 = vperm.slane %v2275, %v2280
        %v2283 = vunpack.c.l.s4 1934713408
        %v2284 = vunpack.c.0.s8 %v2283
        %v2285 = vperm.slane %v2277, %v2284
        %v2286 = vrot.slane %v2273, 4
        %v2287 = vsel %vm960, %v2286, %v2267
        %v2288 = vrot.slane %v2267, 4
        %v2289 = vsel %vm960, %v2273, %v2288
        %v2291 = vunpack.c.l.s4 1934713408
        %v2292 = vunpack.c.0.s8 %v2291
        %v2293 = vperm.slane %v2287, %v2292
        %v2295 = vunpack.c.l.s4 1934713408
        %v2296 = vunpack.c.0.s8 %v2295
        %v2297 = vperm.slane %v2289, %v2296
        %v2298 = vrot.slane %v2293, 4
        %v2299 = vsel %vm960, %v2298, %v2281
        %v2300 = vrot.slane %v2281, 4
        %v2301 = vsel %vm960, %v2293, %v2300
        %v2302 = vrot.slane %v2297, 4
        %v2303 = vsel %vm960, %v2302, %v2285
        %v2304 = vrot.slane %v2285, 4
        %v2305 = vsel %vm960, %v2297, %v2304
        %2308 = vrot.lane.b32.xlu0 %v2247, 8
        %v2309 = vpop.permute.xlu0 %2308
        %2310 = vrot.lane.b32.xlu0 %v2301, 8
        %v2311 = vpop.permute.xlu0 %2310
        %2316 = vrot.lane.b32.xlu0 %v2249, 16
        %v2317 = vpop.permute.xlu0 %2316
        %2318 = vrot.lane.b32.xlu0 %v2303, 16
        %v2319 = vpop.permute.xlu0 %2318
        %2324 = vrot.lane.b32.xlu0 %v2251, 24
        %v2325 = vpop.permute.xlu0 %2324
        %2326 = vrot.lane.b32.xlu0 %v2305, 24
        %v2327 = vpop.permute.xlu0 %2326
        %v2330 = vsel %vm1684, %v2245, %v2309
        %v2331 = vsel %vm1684, %v2299, %v2311
        %vm2332 = vcmask 130048
        %v2333 = vsel %vm2332, %v2330, %v2317
        %v2334 = vsel %vm2332, %v2331, %v2319
        %vm2335 = vcmask 195584
        %v2336 = vsel %vm2335, %v2333, %v2325
        %v2337 = vsel %vm2335, %v2334, %v2327
        %v2338 = vpack.c.bf16 %v2337, %v2336
        %v2339 = vld [vmem:[%s653] sm:$0xf]
        %v2340 = vld [vmem:[%s653 + $0x4] sm:$0xf]
        %v2341 = vld [vmem:[%s653 + $0x8] sm:$0xf]
        %v2342 = vld [vmem:[%s653 + $0xc] sm:$0xf]
        %v2343 = vperm.slane %v786, 2
        %v2348 = vunpack.c.l.b16 %v2339
        %v2349 = vunpack.c.l.b16 %v2340
        %v2350 = vunpack.c.l.b16 %v2341
        %v2351 = vunpack.c.l.b16 %v2342
        %v2352 = vpack.c.b16 %v2349, %v2348
        %v2353 = vpack.c.b16 %v2351, %v2350
        %v2357 = vsel %vm787, %v2338, 0
        %2359 = vmatpush.bf16.msra.mxu0 0
        %2360 = vmatpush.bf16.msra.mxu0 0
        %2361 = vmatpush.bf16.msra.mxu0 0
        %2362 = vmatpush.bf16.msra.mxu0 0
        %2363 = vmatpush.bf16.msra.mxu0 0
        %2364 = vmatpush.bf16.msra.mxu0 0
        %2365 = vmatpush.bf16.msra.mxu0 %v2353
        %2366 = vmatpush.bf16.msra.mxu0 %v2352
        %2367 = vmatmul.bf16.gmra.mxu0 %v2357
        %v2368 = vpop.f32.mrf.mxu0
        %v2369 = vadd.f32 %v2343, %v2368
        %v2370 = vpop.f32.mrf.mxu0
        %v2371 = vadd.f32 %v2343, %v2370
        %2372 = vdwg.mxu0
        %v2373 = vadd.f32 %v784, %v2369
        %v2374 = vadd.f32 %v785, %v2371
        %v2375 = vsel %vm787, %v2373, 0.0
        %2376 = vadd.xlane.f32.xlu0 %v2375
        %v2377 = vpop.xlane.xlu0 %2376
        %v2378 = vsel %vm787, %v2374, 0.0
        %2379 = vadd.xlane.f32.xlu0 %v2378
        %v2380 = vpop.xlane.xlu0 %2379
        %v2381 = vmul.f32 %v2377, %v800
        %v2382 = vmul.f32 %v2380, %v800
        %v2383 = vsub.f32 %v2373, %v2381
        %v2384 = vsub.f32 %v2374, %v2382
        %v2385 = vmul.f32 %v2383, %v2383
        %v2386 = vmul.f32 %v2384, %v2384
        %v2387 = vsel %vm787, %v2385, 0.0
        %2388 = vadd.xlane.f32.xlu0 %v2387
        %v2389 = vpop.xlane.xlu0 %2388
        %v2390 = vsel %vm787, %v2386, 0.0
        %2391 = vadd.xlane.f32.xlu0 %v2390
        %v2392 = vpop.xlane.xlu0 %2391
        %v2393 = vmul.f32 %v2389, %v800
        %v2394 = vmul.f32 %v2392, %v800
        %v2395 = vadd.f32 %v2393, 1e-05
        %v2396 = vadd.f32 %v2394, 1e-05
        %v2397 = vrsqrt.pop %v2395
        %v2398 = vmul.f32 %v2397, %v2395
        %v2399 = vmul.f32 %v2398, %v2397
        %v2400 = vmul.f32 0.5, %v2399
        %v2401 = vsub.f32 1.5, %v2400
        %v2402 = vmul.f32 %v2397, %v2401
        %vm2403 = vweird.f32 %v2395
        %vm2404 = vweird.f32 %v2397
        %vm2405 = vmor %vm2403, %vm2404
        %v2406 = vsel %vm2405, %v2397, %v2402
        %v2407 = vrsqrt.pop %v2396
        %v2408 = vmul.f32 %v2407, %v2396
        %v2409 = vmul.f32 %v2408, %v2407
        %v2410 = vmul.f32 0.5, %v2409
        %v2411 = vsub.f32 1.5, %v2410
        %v2412 = vmul.f32 %v2407, %v2411
        %vm2413 = vweird.f32 %v2396
        %vm2414 = vweird.f32 %v2407
        %vm2415 = vmor %vm2413, %vm2414
        %v2416 = vsel %vm2415, %v2407, %v2412
        %v2417 = vmul.f32 %v2383, %v2406
        %v2418 = vmul.f32 %v2384, %v2416
        %v2419 = vperm.slane %v786, 3
        %v2420 = vmul.f32 %v2417, %v2419
        %v2421 = vmul.f32 %v2418, %v2419
        %v2422 = vperm.slane %v786, 4
        %v2423 = vadd.f32 %v2420, %v2422
        %v2424 = vadd.f32 %v2421, %v2422
        %v2425 = vpack.c.bf16 %v2424, %v2423
        %v2426 = vld [vmem:[%s663] sm:$0xf]
        %v2427 = vld [vmem:[%s663 + $0x4] sm:$0xf]
        %v2428 = vld [vmem:[%s663 + $0x8] sm:$0xf]
        %v2429 = vld [vmem:[%s663 + $0xc] sm:$0xf]
        %v2430 = vld [vmem:[%s764] sm:$0x1]
        %v2432 = vperm.slane %v2430, 0
        %v2438 = vunpack.c.l.b16 %v2426
        %v2439 = vunpack.c.l.b16 %v2427
        %v2440 = vunpack.c.l.b16 %v2428
        %v2441 = vunpack.c.l.b16 %v2429
        %v2442 = vpack.c.b16 %v2439, %v2438
        %v2443 = vpack.c.b16 %v2441, %v2440
        %v2447 = vsel %vm787, %v2425, 0
        %2449 = vmatpush.bf16.msra.mxu0 0
        %2450 = vmatpush.bf16.msra.mxu0 0
        %2451 = vmatpush.bf16.msra.mxu0 0
        %2452 = vmatpush.bf16.msra.mxu0 0
        %2453 = vmatpush.bf16.msra.mxu0 0
        %2454 = vmatpush.bf16.msra.mxu0 0
        %2455 = vmatpush.bf16.msra.mxu0 %v2443
        %2456 = vmatpush.bf16.msra.mxu0 %v2442
        %2457 = vmatmul.bf16.gmra.mxu0 %v2447
        %v2458 = vpop.f32.mrf.mxu0
        %v2459 = vadd.f32 %v2432, %v2458
        %v2460 = vpop.f32.mrf.mxu0
        %v2461 = vadd.f32 %v2432, %v2460
        %2462 = vdwg.mxu0
        %v2463 = vmul.f32 %v2459, 0.5
        %v2464 = vmul.f32 %v2461, 0.5
        %v2465 = vmul.f32 %v2459, 0.70710677
        %v2466 = vmul.f32 %v2461, 0.70710677
        %v2467 = vmul.f32 %v2465, %v2465
        %v2468 = vmin.f32 16.0, %v2467
        %v2469 = vmul.f32 %v2468, 2.1237322e-06
        %v2470 = vadd.f32 %v2469, 0.00028619796
        %v2471 = vmul.f32 %v2468, %v2470
        %v2472 = vadd.f32 %v2471, 0.0036580483
        %v2473 = vmul.f32 %v2468, %v2472
        %v2474 = vadd.f32 %v2473, 0.05243302
        %v2475 = vmul.f32 %v2468, %v2474
        %v2476 = vadd.f32 %v2475, 0.18741608
        %v2477 = vmul.f32 %v2468, %v2476
        %v2478 = vadd.f32 %v2477, 1.1283791
        %v2479 = vmul.f32 %v2465, %v2478
        %v2480 = vmul.f32 %v2468, 3.8918573e-05
        %v2481 = vadd.f32 %v2480, 0.001143296
        %v2482 = vmul.f32 %v2468, %v2481
        %v2483 = vadd.f32 %v2482, 0.014752088
        %v2484 = vmul.f32 %v2468, %v2483
        %v2485 = vadd.f32 %v2484, 0.112945676
        %v2486 = vmul.f32 %v2468, %v2485
        %v2487 = vadd.f32 %v2486, 0.4994258
        %v2488 = vmul.f32 %v2468, %v2487
        %v2489 = vadd.f32 %v2488, 1.0
        %v2490 = vrcp.pop %v2489
        %v2491 = vmul.f32 %v2489, %v2490
        %v2492 = vsub.f32 1.0, %v2491
        %v2493 = vmul.f32 %v2490, %v2492
        %v2494 = vadd.f32 %v2490, %v2493
        %vm2495 = vweird.f32 %v2489
        %vm2496 = vweird.f32 %v2490
        %vm2497 = vmor %vm2495, %vm2496
        %v2498 = vsel %vm2497, %v2490, %v2494
        %v2499 = vand.u32 2147483647, %v2489
        %vm2500 = vcmp.eq.f32.partialorder %v2499, 8.507059e+37
        %v2501 = vand.u32 %v2489, 2147483648
        %v2502 = vor.u32 1.1754944e-38, %v2501
        %v2503 = vsel %vm2500, %v2502, %v2498
        %v2504 = vmul.f32 %v2479, %v2503
        %v2505 = vmin.f32 %v2504, 1.0
        %v2506 = vmax.f32 %v2505, -1.0
        %v2507 = vmul.f32 %v2466, %v2466
        %v2508 = vmin.f32 16.0, %v2507
        %v2509 = vmul.f32 %v2508, 2.1237322e-06
        %v2510 = vadd.f32 %v2509, 0.00028619796
        %v2511 = vmul.f32 %v2508, %v2510
        %v2512 = vadd.f32 %v2511, 0.0036580483
        %v2513 = vmul.f32 %v2508, %v2512
        %v2514 = vadd.f32 %v2513, 0.05243302
        %v2515 = vmul.f32 %v2508, %v2514
        %v2516 = vadd.f32 %v2515, 0.18741608
        %v2517 = vmul.f32 %v2508, %v2516
        %v2518 = vadd.f32 %v2517, 1.1283791
        %v2519 = vmul.f32 %v2466, %v2518
        %v2520 = vmul.f32 %v2508, 3.8918573e-05
        %v2521 = vadd.f32 %v2520, 0.001143296
        %v2522 = vmul.f32 %v2508, %v2521
        %v2523 = vadd.f32 %v2522, 0.014752088
        %v2524 = vmul.f32 %v2508, %v2523
        %v2525 = vadd.f32 %v2524, 0.112945676
        %v2526 = vmul.f32 %v2508, %v2525
        %v2527 = vadd.f32 %v2526, 0.4994258
        %v2528 = vmul.f32 %v2508, %v2527
        %v2529 = vadd.f32 %v2528, 1.0
        %v2530 = vrcp.pop %v2529
        %v2531 = vmul.f32 %v2529, %v2530
        %v2532 = vsub.f32 1.0, %v2531
        %v2533 = vmul.f32 %v2530, %v2532
        %v2534 = vadd.f32 %v2530, %v2533
        %vm2535 = vweird.f32 %v2529
        %vm2536 = vweird.f32 %v2530
        %vm2537 = vmor %vm2535, %vm2536
        %v2538 = vsel %vm2537, %v2530, %v2534
        %v2539 = vand.u32 2147483647, %v2529
        %vm2540 = vcmp.eq.f32.partialorder %v2539, 8.507059e+37
        %v2541 = vand.u32 %v2529, 2147483648
        %v2542 = vor.u32 1.1754944e-38, %v2541
        %v2543 = vsel %vm2540, %v2542, %v2538
        %v2544 = vmul.f32 %v2519, %v2543
        %v2545 = vmin.f32 %v2544, 1.0
        %v2546 = vmax.f32 %v2545, -1.0
        %v2547 = vadd.f32 %v2506, 1.0
        %v2548 = vadd.f32 %v2546, 1.0
        %v2549 = vmul.f32 %v2463, %v2547
        %v2550 = vmul.f32 %v2464, %v2548
        %v2551 = vpack.c.bf16 %v2550, %v2549
        %v2552 = vld [vmem:[%s769] sm:$0xf]
        %v2553 = vld [vmem:[%s769 + $0x4] sm:$0xf]
        %v2554 = vld [vmem:[%s769 + $0x8] sm:$0xf]
        %v2555 = vld [vmem:[%s769 + $0xc] sm:$0xf]
        %v2556 = vld [vmem:[%s769 + $0x10] sm:$0xf]
        %v2557 = vld [vmem:[%s769 + $0x14] sm:$0xf]
        %v2558 = vld [vmem:[%s769 + $0x18] sm:$0xf]
        %v2559 = vld [vmem:[%s769 + $0x1c] sm:$0xf]
        %v2560 = vperm.slane %v786, 5
        %v2569 = vunpack.c.l.b16 %v2552
        %v2570 = vunpack.c.l.b16 %v2553
        %v2571 = vunpack.c.l.b16 %v2554
        %v2572 = vunpack.c.l.b16 %v2555
        %v2573 = vunpack.c.l.b16 %v2556
        %v2574 = vunpack.c.l.b16 %v2557
        %v2575 = vunpack.c.l.b16 %v2558
        %v2576 = vunpack.c.l.b16 %v2559
        %v2577 = vpack.c.b16 %v2570, %v2569
        %v2578 = vpack.c.b16 %v2572, %v2571
        %v2579 = vpack.c.b16 %v2574, %v2573
        %v2580 = vpack.c.b16 %v2576, %v2575
        %vm2585 = vcmask 523264
        %v2587 = vsel %vm2585, %v2551, 0
        %2589 = vmatpush.bf16.msra.mxu0 0
        %2590 = vmatpush.bf16.msra.mxu0 0
        %2591 = vmatpush.bf16.msra.mxu0 0
        %2592 = vmatpush.bf16.msra.mxu0 0
        %2593 = vmatpush.bf16.msra.mxu0 %v2580
        %2594 = vmatpush.bf16.msra.mxu0 %v2579
        %2595 = vmatpush.bf16.msra.mxu0 %v2578
        %2596 = vmatpush.bf16.msra.mxu0 %v2577
        %2597 = vmatmul.bf16.gmra.mxu0 %v2587
        %v2598 = vpop.f32.mrf.mxu0
        %v2599 = vadd.f32 %v2560, %v2598
        %v2600 = vpop.f32.mrf.mxu0
        %v2601 = vadd.f32 %v2560, %v2600
        %2602 = vdwg.mxu0
        %v2603 = vadd.f32 %v2423, %v2599
        %v2604 = vadd.f32 %v2424, %v2601
        %2605 = vst.msk [vmem:[#allocation2] sm:$0xff] %vm787, %v2603
        %2606 = vst.msk [vmem:[#allocation2 + $0x8] sm:$0xff] %vm787, %v2604
        %p2607 = scmp.eq.s32.totalorder %s37, 1
        // Predicated region
        $region113: #{tpu_custom_call.1} parent=83 // pred_check
          %p2608 = pneg %p2607
        $region114: #{tpu_custom_call.1} parent=83 // pred_check_branch
          %2610 = sbr.rel (%p2608) target = $region116
        $region115: #{tpu_custom_call.1} parent=83 // pred_region
          %v2611 = vld [vmem:[%s10] sm:$0x1]
          %v2612 = vld [vmem:[#allocation12] sm:$0x1]
          %v2613 = vsel %vm787, %v2603, 0.0
          %2614 = vadd.xlane.f32.xlu0 %v2613
          %v2615 = vpop.xlane.xlu0 %2614
          %v2616 = vsel %vm787, %v2604, 0.0
          %2617 = vadd.xlane.f32.xlu0 %v2616
          %v2618 = vpop.xlane.xlu0 %2617
          %v2619 = vmul.f32 %v2615, %v800
          %v2620 = vmul.f32 %v2618, %v800
          %v2621 = vsub.f32 %v2603, %v2619
          %v2622 = vsub.f32 %v2604, %v2620
          %v2623 = vmul.f32 %v2621, %v2621
          %v2624 = vmul.f32 %v2622, %v2622
          %v2625 = vsel %vm787, %v2623, 0.0
          %2626 = vadd.xlane.f32.xlu0 %v2625
          %v2627 = vpop.xlane.xlu0 %2626
          %v2628 = vsel %vm787, %v2624, 0.0
          %2629 = vadd.xlane.f32.xlu0 %v2628
          %v2630 = vpop.xlane.xlu0 %2629
          %v2631 = vmul.f32 %v2627, %v800
          %v2632 = vmul.f32 %v2630, %v800
          %v2633 = vadd.f32 %v2631, 1e-05
          %v2634 = vadd.f32 %v2632, 1e-05
          %v2635 = vrsqrt.pop %v2633
          %v2636 = vmul.f32 %v2635, %v2633
          %v2637 = vmul.f32 %v2636, %v2635
          %v2638 = vmul.f32 0.5, %v2637
          %v2639 = vsub.f32 1.5, %v2638
          %v2640 = vmul.f32 %v2635, %v2639
          %vm2641 = vweird.f32 %v2633
          %vm2642 = vweird.f32 %v2635
          %vm2643 = vmor %vm2641, %vm2642
          %v2644 = vsel %vm2643, %v2635, %v2640
          %v2645 = vrsqrt.pop %v2634
          %v2646 = vmul.f32 %v2645, %v2634
          %v2647 = vmul.f32 %v2646, %v2645
          %v2648 = vmul.f32 0.5, %v2647
          %v2649 = vsub.f32 1.5, %v2648
          %v2650 = vmul.f32 %v2645, %v2649
          %vm2651 = vweird.f32 %v2634
          %vm2652 = vweird.f32 %v2645
          %vm2653 = vmor %vm2651, %vm2652
          %v2654 = vsel %vm2653, %v2645, %v2650
          %v2655 = vmul.f32 %v2621, %v2644
          %v2656 = vmul.f32 %v2622, %v2654
          %v2658 = vperm.slane %v2611, 0
          %v2660 = vmul.f32 %v2655, %v2658
          %v2661 = vmul.f32 %v2656, %v2658
          %v2663 = vperm.slane %v2612, 0
          %v2665 = vadd.f32 %v2660, %v2663
          %v2666 = vadd.f32 %v2661, %v2663
          %v2667 = vld [vmem:[%s12] sm:$0x1]
          %v2669 = vperm.slane %v2667, 0
          %v2671 = vmul.f32 %v2665, %v2669
          %v2672 = vmul.f32 %v2666, %v2669
          %v2673 = vsel %vm787, %v2671, 0.0
          %2674 = vadd.xlane.f32.xlu0 %v2673
          %v2675 = vpop.xlane.xlu0 %2674
          %v2676 = vsel %vm787, %v2672, 0.0
          %2677 = vadd.xlane.f32.xlu0 %v2676
          %v2678 = vpop.xlane.xlu0 %2677
          %v2679 = vld [vmem:[#allocation3] sm:$0x1]
          %v2681 = vperm.slane %v2679, 0
          %v2683 = vadd.f32 %v2675, %v2681
          %v2684 = vadd.f32 %v2678, %v2681
          %vm2685 = vcmask 7168
          %v2686 = vsel %vm2685, %v2683, -inf
          %v2687 = vrot.slane %v2686, 4
          %v2688 = vmax.f32 %v2686, %v2687
          %v2689 = vrot.slane %v2688, 2
          %v2690 = vmax.f32 %v2688, %v2689
          %v2691 = vrot.slane %v2690, 1
          %v2692 = vmax.f32 %v2690, %v2691
          %v2693 = vsel %vm2685, %v2684, -inf
          %v2694 = vrot.slane %v2693, 4
          %v2695 = vmax.f32 %v2693, %v2694
          %v2696 = vrot.slane %v2695, 2
          %v2697 = vmax.f32 %v2695, %v2696
          %v2698 = vrot.slane %v2697, 1
          %v2699 = vmax.f32 %v2697, %v2698
          %v2700 = vsub.f32 %v2683, %v2692
          %v2701 = vsub.f32 %v2684, %v2699
          %v2702 = vmul.f32 %v2700, 1.442695
          %v2703 = vpow.pop %v2702
          %v2704 = vmul.f32 %v2701, 1.442695
          %v2705 = vpow.pop %v2704
          %v2706 = vsel %vm2685, %v2703, 0.0
          %v2707 = vrot.slane %v2706, 4
          %v2708 = vadd.f32 %v2706, %v2707
          %v2709 = vrot.slane %v2708, 2
          %v2710 = vadd.f32 %v2708, %v2709
          %v2711 = vrot.slane %v2710, 1
          %v2712 = vadd.f32 %v2710, %v2711
          %v2713 = vsel %vm2685, %v2705, 0.0
          %v2714 = vrot.slane %v2713, 4
          %v2715 = vadd.f32 %v2713, %v2714
          %v2716 = vrot.slane %v2715, 2
          %v2717 = vadd.f32 %v2715, %v2716
          %v2718 = vrot.slane %v2717, 1
          %v2719 = vadd.f32 %v2717, %v2718
          %v2720 = vrcp.pop %v2712
          %v2721 = vrcp.pop %v2719
          %v2722 = vmul.f32 %v2703, %v2720
          %v2723 = vmul.f32 %v2705, %v2721
          %2725 = vset.pattern.permute.xlu0 0
          %2726 = vperm.xlu0 %2725, %v2722
          %v2727 = vpop.permute.xlu0 %2726
          %2730 = vset.pattern.permute.xlu0 0
          %2731 = vperm.xlu0 %2730, %v2723
          %v2732 = vpop.permute.xlu0 %2731
          %v2734 = vmul.f32 %v2727, %v2665
          %v2735 = vmul.f32 %v2732, %v2666
          %v2736 = vsel %vm787, %v2734, 0.0
          %v2737 = vrot.slane %v2736, 4
          %v2738 = vadd.f32 %v2736, %v2737
          %v2739 = vrot.slane %v2738, 2
          %v2740 = vadd.f32 %v2738, %v2739
          %v2741 = vrot.slane %v2740, 1
          %v2742 = vadd.f32 %v2740, %v2741
          %v2743 = vsel %vm787, %v2735, 0.0
          %v2744 = vrot.slane %v2743, 4
          %v2745 = vadd.f32 %v2743, %v2744
          %v2746 = vrot.slane %v2745, 2
          %v2747 = vadd.f32 %v2745, %v2746
          %v2748 = vrot.slane %v2747, 1
          %v2749 = vadd.f32 %v2747, %v2748
          %v2750 = vpack.c.bf16 %v2742, %v2742
          %v2751 = vpack.c.bf16 %v2749, %v2749
          %v2752 = vld [vmem:[%s14] sm:$0xf]
          %v2753 = vld [vmem:[%s14 + $0x4] sm:$0xf]
          %v2754 = vld [vmem:[%s14 + $0x8] sm:$0xf]
          %v2755 = vld [vmem:[%s14 + $0xc] sm:$0xf]
          %v2756 = vld [vmem:[%s15] sm:$0x1]
          %v2758 = vperm.slane %v2756, 0
          %v2762 = vunpack.c.l.b16 %v2750
          %v2763 = vunpack.c.l.b16 %v2751
          %vm2764 = vcmask 1041409
          %v2765 = vsel %vm2764, %v2763, %v2762
          %v2766 = vpack.c.b16 %v2765, %v2765
          %v2771 = vunpack.c.l.b16 %v2752
          %v2772 = vunpack.c.l.b16 %v2753
          %v2773 = vunpack.c.l.b16 %v2754
          %v2774 = vunpack.c.l.b16 %v2755
          %v2775 = vpack.c.b16 %v2772, %v2771
          %v2776 = vpack.c.b16 %v2774, %v2773
          %v2780 = vsel %vm787, %v2766, 0
          %2782 = vmatpush.bf16.msra.mxu0 0
          %2783 = vmatpush.bf16.msra.mxu0 0
          %2784 = vmatpush.bf16.msra.mxu0 0
          %2785 = vmatpush.bf16.msra.mxu0 0
          %2786 = vmatpush.bf16.msra.mxu0 0
          %2787 = vmatpush.bf16.msra.mxu0 0
          %2788 = vmatpush.bf16.msra.mxu0 %v2776
          %2789 = vmatpush.bf16.msra.mxu0 %v2775
          %2790 = vmatmul.bf16.gmra.mxu0 %v2780
          %v2791 = vpop.f32.mrf.mxu0
          %v2792 = vadd.f32 %v2758, %v2791
          %v2793 = vpop.f32.mrf.mxu0
          %2794 = vdwg.mxu0
          %v2796 = vrot.slane %v2792, 1
          %vm2798 = vcmask 122880
          %2799 = vst.msk [vmem:[#allocation13] sm:$0x1] %vm2798, %v2792
          %2800 = vst.msk [vmem:[#allocation13 + $0x1] sm:$0x1] %vm2798, %v2796
        $region116: #{tpu_custom_call.1} parent=83 // pred_fallthru
          _
        // Predicated region
        $region117: #{tpu_custom_call.1} parent=83 // pred_check
          %p2801 = pneg %p443
        $region118: #{tpu_custom_call.1} parent=83 // pred_check_branch
          %2803 = sbr.rel (%p2801) target = $region120
        $region119: #{tpu_custom_call.1} parent=83 // pred_region
          %s2804 = smul.u32 2, %s36
          %2806 = vsyncadd [#allocation6], 0
          %s2807 = scalar_lea.hbm %s16, %s2804
          %s2808 = sshll.u32 [#allocation13], 4
          %s2809 = int_to_ptr.vmem [resolvable:$true] %s2808
          %s2810 = sshll.u32 %s2807, 4
          %s2811 = int_to_ptr.hbm [resolvable:$true] %s2810
          %2816 = dma.vmem_to_hbm [thread:$0]  %s2809, 32, %s2811, [#allocation6], 16, 16, 1
        $region120: #{tpu_custom_call.1} parent=83 // pred_fallthru
          _
        // Predicated region
        $region121: #{tpu_custom_call.1} parent=83 // pred_check
          %p2817 = pneg %p443
        $region122: #{tpu_custom_call.1} parent=83 // pred_check_branch
          %2819 = sbr.rel (%p2817) target = $region124
        $region123: #{tpu_custom_call.1} parent=83 // pred_region
          %2821 = dma.done [#allocation6], 32
        $region124: #{tpu_custom_call.1} parent=83 // pred_fallthru
          _
      $region84: #{tpu_custom_call.1} parent=5 // pred_fallthru
        _
      %p2822 = scmp.le.s32.totalorder 2, %s27
      // Predicated region
      $region125: #{tpu_custom_call.1} parent=5 // pred_check
        %p2823 = pneg %p2822
      $region126: #{tpu_custom_call.1} parent=5 // pred_check_branch
        %2825 = sbr.rel (%p2823) target = $region128
      $region127: #{tpu_custom_call.1} parent=5 // pred_region
        %s2826 = ssub.s32 %s27, 2
      $region128: #{tpu_custom_call.1} parent=5 // pred_fallthru
        _
    $region6: #{tpu_custom_call.1} parent=1 // loop_footer
      %s31 = sadd.s32 1, %s27
    $region7: #{tpu_custom_call.1} parent=1 // loop_footer_branch
      %26 = sbr.rel target = $region3
    $region8: #{tpu_custom_call.1} parent=1 // loop_exit
      _
    %2827 = vsyncpa [#allocation5], 1
    %s2828 = scalar_lea.sflag [#allocation5], 1
    %2829 = vsyncpa %s2828, 1
    %2830 = vsyncpa [#allocation8], 1
    %2831 = vsyncpa [#allocation6], 1
    %s2832 = scalar_lea.sflag [#allocation6], 1
    %2833 = vsyncpa %s2832, 1

</llo_original>
